<compile_context>
chip_gen: v5e
topology: v5e:2x2
jax: 0.10.0
libtpu: 0.0.40
codegen_flags: <defaults>
</compile_context>

<pallas_src>
import numpy as np
import jax
import jax.numpy as jnp
from jax.experimental import pallas as pl
from jax.experimental.pallas import tpu as pltpu


_VMEM_LIMIT = 32 * 1024 * 1024  # safe on v5e/v6e (128 MiB) and v7x (64 MiB)


# ----------------------------------------------------------------------------
# Pallas kernel: y = relu(A @ W + b), tiled over rows of A.
# A:(M,K) bf16, W:(K,N) bf16, b:(1,N) f32 -> y:(M,N) out_dtype (f32 accumulate).
# ----------------------------------------------------------------------------
def _mm_bias_relu_kernel(a_ref, w_ref, b_ref, o_ref):
    y = jnp.dot(a_ref[...], w_ref[...], preferred_element_type=jnp.float32)
    y = jnp.maximum(y + b_ref[...], 0.0)
    o_ref[...] = y.astype(o_ref.dtype)


def mm_bias_relu(a, w, b2d, *, tm_max=512, out_dtype=jnp.bfloat16):
    M, K = a.shape
    K2, Nout = w.shape
    assert K == K2, (a.shape, w.shape)
    tm = M if M <= tm_max else tm_max        # full block, or 512 (mult. of 8/16)
    grid = (pl.cdiv(M, tm),)
    return pl.pallas_call(
        _mm_bias_relu_kernel,
        out_shape=jax.ShapeDtypeStruct((M, Nout), out_dtype),
        grid=grid,
        in_specs=[
            pl.BlockSpec((tm, K), lambda i: (i, 0)),      # A row-tile
            pl.BlockSpec((K, Nout), lambda i: (0, 0)),    # W resident
            pl.BlockSpec((1, Nout), lambda i: (0, 0)),    # bias resident
        ],
        out_specs=pl.BlockSpec((tm, Nout), lambda i: (i, 0)),
        compiler_params=pltpu.CompilerParams(
            dimension_semantics=("parallel",),
            vmem_limit_bytes=_VMEM_LIMIT,
        ),
    )(a, w, b2d)


# ----------------------------------------------------------------------------
# Pallas kernel: fused fc + critic head.
#   h = relu(x @ Wf + bf)          (N, hidden)  f32
#   c = h @ Wc + bc                (N, 1)       f32
# ----------------------------------------------------------------------------
def _fc_critic_kernel(x_ref, wf_ref, bf_ref, wc_ref, bc_ref, h_ref, c_ref):
    h = jnp.dot(x_ref[...], wf_ref[...], preferred_element_type=jnp.float32)
    h = jnp.maximum(h + bf_ref[...], 0.0)
    h_ref[...] = h
    c_ref[...] = (
        jnp.dot(h, wc_ref[...], preferred_element_type=jnp.float32) + bc_ref[...]
    )


def fc_critic(x, wf, bf, wc, bc, *, tm_max=512):
    N, K = x.shape
    hidden = wf.shape[1]
    tm = N if N <= tm_max else tm_max
    grid = (pl.cdiv(N, tm),)
    return pl.pallas_call(
        _fc_critic_kernel,
        out_shape=(
            jax.ShapeDtypeStruct((N, hidden), jnp.float32),
            jax.ShapeDtypeStruct((N, 1), jnp.float32),
        ),
        grid=grid,
        in_specs=[
            pl.BlockSpec((tm, K), lambda i: (i, 0)),        # x row-tile
            pl.BlockSpec((K, hidden), lambda i: (0, 0)),    # fc weight
            pl.BlockSpec((1, hidden), lambda i: (0, 0)),    # fc bias
            pl.BlockSpec((hidden, 1), lambda i: (0, 0)),    # critic weight
            pl.BlockSpec((1, 1), lambda i: (0, 0)),         # critic bias
        ],
        out_specs=(
            pl.BlockSpec((tm, hidden), lambda i: (i, 0)),
            pl.BlockSpec((tm, 1), lambda i: (i, 0)),
        ),
        compiler_params=pltpu.CompilerParams(
            dimension_semantics=("parallel",),
            vmem_limit_bytes=_VMEM_LIMIT,
        ),
    )(x, wf, bf.reshape(1, hidden), wc, bc.reshape(1, 1))


# ----------------------------------------------------------------------------
# Channels-last im2col glue (plain JAX): rows ordered (N, Ho, Wo), features
# ordered (kh, kw, C) -- matching the prepared weight layout below.  No
# transposes; only slices + one stack + reshape.
# ----------------------------------------------------------------------------
def im2col_nhwc(x, k, stride):
    N, H, W, C = x.shape
    Ho = (H - k) // stride + 1
    Wo = (W - k) // stride + 1
    cols = []
    for kh in range(k):
        for kw in range(k):
            cols.append(
                x[:, kh:kh + stride * Ho:stride, kw:kw + stride * Wo:stride, :]
            )  # (N, Ho, Wo, C)
    cols = jnp.stack(cols, axis=3)                      # (N, Ho, Wo, k*k, C)
    cols = cols.reshape(N * Ho * Wo, k * k * C)
    return cols, Ho, Wo


def conv_relu_nhwc(x, w_mat, b, *, k, stride):
    """x:(N,H,W,C) bf16, w_mat:(k*k*Cin, Cout) bf16 -> (N,Ho,Wo,Cout) bf16."""
    N = x.shape[0]
    Cout = w_mat.shape[1]
    cols, Ho, Wo = im2col_nhwc(x, k, stride)
    y = mm_bias_relu(cols, w_mat, b.reshape(1, Cout), out_dtype=jnp.bfloat16)
    return y.reshape(N, Ho, Wo, Cout)


# ----------------------------------------------------------------------------
# Deterministic parameter init (orthogonal like the PyTorch module), kept in
# PyTorch layout, then a one-time prepare_params() does every permute /
# transpose / cast / scale-fold so the forward pass has zero weight reshuffling.
# ----------------------------------------------------------------------------
def orthogonal(key, shape, gain):
    out = shape[0]
    fan_in = int(np.prod(shape[1:]))
    a = jax.random.normal(key, (max(out, fan_in), min(out, fan_in)), jnp.float32)
    q, r = jnp.linalg.qr(a)
    q = q * jnp.sign(jnp.diag(r))[None, :]
    if out < fan_in:
        q = q.T
    return (gain * q[:out, :fan_in]).reshape(shape).astype(jnp.float32)


def init_cnnbase_params(key, num_inputs, hidden_size):
    ks = jax.random.split(key, 5)
    relu_gain = float(np.sqrt(2.0))
    p = {}
    p["conv1_w"] = orthogonal(ks[0], (32, num_inputs, 8, 8), relu_gain)
    p["conv1_b"] = jnp.zeros((32,), jnp.float32)
    p["conv2_w"] = orthogonal(ks[1], (64, 32, 4, 4), relu_gain)
    p["conv2_b"] = jnp.zeros((64,), jnp.float32)
    p["conv3_w"] = orthogonal(ks[2], (32, 64, 3, 3), relu_gain)
    p["conv3_b"] = jnp.zeros((32,), jnp.float32)
    p["fc_w"] = orthogonal(ks[3], (hidden_size, 32 * 7 * 7), relu_gain)
    p["fc_b"] = jnp.zeros((hidden_size,), jnp.float32)
    p["critic_w"] = orthogonal(ks[4], (1, hidden_size), 1.0)
    p["critic_b"] = jnp.zeros((1,), jnp.float32)
    return p


def prepare_params(p):
    """PyTorch-layout params -> kernel-ready (permuted, transposed, bf16)."""
    def conv_wmat(w):  # (Cout, Cin, kh, kw) -> (kh*kw*Cin, Cout), matches im2col
        Cout, Cin, k, _ = w.shape
        return w.transpose(2, 3, 1, 0).reshape(k * k * Cin, Cout)

    hidden = p["fc_w"].shape[0]
    # PyTorch flattens NCHW (C,H,W); we flatten NHWC (H,W,C) -> permute fc_w once.
    fc_w_nhwc = (
        p["fc_w"].reshape(hidden, 32, 7, 7).transpose(0, 2, 3, 1).reshape(hidden, -1)
    )
    q = {
        # fold the module's /255 input scale into conv1's weights (exact)
        "w1": (conv_wmat(p["conv1_w"]) / 255.0).astype(jnp.bfloat16),
        "b1": p["conv1_b"],
        "w2": conv_wmat(p["conv2_w"]).astype(jnp.bfloat16),
        "b2": p["conv2_b"],
        "w3": conv_wmat(p["conv3_w"]).astype(jnp.bfloat16),
        "b3": p["conv3_b"],
        "wf": fc_w_nhwc.T.astype(jnp.bfloat16),           # (1568, hidden)
        "bf": p["fc_b"],
        "wc": p["critic_w"].T.astype(jnp.float32),        # (hidden, 1)
        "bc": p["critic_b"],
    }
    return q


# ----------------------------------------------------------------------------
# CNNBase.forward (recurrent=False)
# ----------------------------------------------------------------------------
def cnnbase_forward(params, inputs, rnn_hxs, masks):
    N = inputs.shape[0]
    # NCHW -> NHWC once (cast to bf16 first to halve the transpose traffic).
    x = inputs.astype(jnp.bfloat16).transpose(0, 2, 3, 1)
    # main: conv(8,s4)+ReLU -> conv(4,s2)+ReLU -> conv(3,s1)+ReLU -> Flatten
    #       -> Linear+ReLU ; /255 already folded into w1.
    x = conv_relu_nhwc(x, params["w1"], params["b1"], k=8, stride=4)  # (N,20,20,32)
    x = conv_relu_nhwc(x, params["w2"], params["b2"], k=4, stride=2)  # (N, 9, 9,64)
    x = conv_relu_nhwc(x, params["w3"], params["b3"], k=3, stride=1)  # (N, 7, 7,32)
    x = x.reshape(N, -1)                                              # (N, 1568)
    hidden, critic = fc_critic(
        x, params["wf"], params["bf"], params["wc"], params["bc"]
    )
    # recurrent=False: no GRU; rnn_hxs passed through untouched, masks unused.
    return critic, hidden, rnn_hxs


if __name__ == "__main__":
    key = jax.random.PRNGKey(0)
    k_inp, k_par = jax.random.split(key)

    batch = 2
    num_inputs = 4          # e.g. 4 stacked Atari frames
    hidden_size = 64        # module default is 512; kept small for the demo
    H = W = 84              # spatial size implied by Linear(32*7*7, hidden)

    inputs = jax.random.uniform(k_inp, (batch, num_inputs, H, W),
                                jnp.float32, 0.0, 255.0)
    rnn_hxs = jnp.zeros((batch, 1), jnp.float32)   # recurrent_hidden_state_size=1
    masks = jnp.ones((batch, 1), jnp.float32)

    params = prepare_params(init_cnnbase_params(k_par, num_inputs, hidden_size))

    critic, feat, hxs_out = cnnbase_forward(params, inputs, rnn_hxs, masks)
    jax.block_until_ready((critic, feat, hxs_out))

    assert critic.shape == (batch, 1)
    assert feat.shape == (batch, hidden_size)
    assert hxs_out.shape == rnn_hxs.shape
    assert bool(jnp.all(jnp.isfinite(critic))) and bool(jnp.all(jnp.isfinite(feat)))
    print("KERNEL_OK")
</pallas_src>

<mosaic_0001>
module attributes {stable_mosaic.version = 11 : i64} {
  func.func @_mm_bias_relu_kernel(%arg0: i32, %arg1: memref<512x256xbf16, #tpu.memory_space<vmem>>, %arg2: memref<256x32xbf16, #tpu.memory_space<vmem>>, %arg3: memref<1x32xf32, #tpu.memory_space<vmem>>, %arg4: memref<512x32xbf16, #tpu.memory_space<vmem>>) attributes {dimension_semantics = [#tpu.dimension_semantics<parallel>], iteration_bounds = array<i64: 2>, scalar_prefetch = 0 : i64, scratch_operands = 0 : i64, tpu.core_type = #tpu.core_type<tc>, window_params = [{transform_indices = @transform_0, window_bounds = array<i64: 512, 256>}, {pipeline_mode = #tpu.pipeline_mode<synchronous>, transform_indices = @transform_1, window_bounds = array<i64: 256, 32>}, {pipeline_mode = #tpu.pipeline_mode<synchronous>, transform_indices = @transform_2, window_bounds = array<i64: 1, 32>}, {transform_indices = @transform_3, window_bounds = array<i64: 512, 32>}]} {
    %c0 = arith.constant 0 : index
    %c0_0 = arith.constant 0 : index
    %0 = vector.load %arg1[%c0, %c0_0] : memref<512x256xbf16, #tpu.memory_space<vmem>>, vector<512x256xbf16>
    %c0_1 = arith.constant 0 : index
    %c0_2 = arith.constant 0 : index
    %1 = vector.load %arg2[%c0_1, %c0_2] : memref<256x32xbf16, #tpu.memory_space<vmem>>, vector<256x32xbf16>
    %cst = arith.constant dense<0.000000e+00> : vector<512x32xf32>
    %2 = tpu.matmul %0, %1, %cst {dimension_numbers = #tpu.dot_dimension_numbers<[1], [0], [0], [1], [0, 0, 1, 1], [], []>} : vector<512x256xbf16>, vector<256x32xbf16>, vector<512x32xf32> -> vector<512x32xf32>
    %c0_3 = arith.constant 0 : index
    %c0_4 = arith.constant 0 : index
    %3 = vector.load %arg3[%c0_3, %c0_4] : memref<1x32xf32, #tpu.memory_space<vmem>>, vector<1x32xf32>
    %4 = vector.broadcast %3 : vector<1x32xf32> to vector<512x32xf32>
    %5 = arith.addf %2, %4 : vector<512x32xf32>
    %cst_5 = arith.constant 0.000000e+00 : f32
    %6 = vector.broadcast %cst_5 : f32 to vector<512x32xf32>
    %7 = arith.maximumf %5, %6 : vector<512x32xf32>
    %8 = arith.truncf %7 : vector<512x32xf32> to vector<512x32xbf16>
    %c0_6 = arith.constant 0 : index
    %c0_7 = arith.constant 0 : index
    %9 = vector.load %arg4[%c0_6, %c0_7] : memref<512x32xbf16, #tpu.memory_space<vmem>>, vector<512x32xbf16>
    tpu.vector_store %arg4[%c0_6, %c0_7], %8 {strides = array<i32>} : memref<512x32xbf16, #tpu.memory_space<vmem>>, vector<512x32xbf16>,
    return
  }
  func.func @transform_0(%arg0: i32) -> (i32, i32) {
    %c0_i32 = arith.constant 0 : i32
    %c0_i32_0 = arith.constant 0 : i32
    return %arg0, %c0_i32 : i32, i32
  }
  func.func @transform_1(%arg0: i32) -> (i32, i32) {
    %c0_i32 = arith.constant 0 : i32
    %c0_i32_0 = arith.constant 0 : i32
    %c0_i32_1 = arith.constant 0 : i32
    return %c0_i32, %c0_i32_0 : i32, i32
  }
  func.func @transform_2(%arg0: i32) -> (i32, i32) {
    %c0_i32 = arith.constant 0 : i32
    %c0_i32_0 = arith.constant 0 : i32
    %c0_i32_1 = arith.constant 0 : i32
    return %c0_i32, %c0_i32_0 : i32, i32
  }
  func.func @transform_3(%arg0: i32) -> (i32, i32) {
    %c0_i32 = arith.constant 0 : i32
    %c0_i32_0 = arith.constant 0 : i32
    return %arg0, %c0_i32 : i32, i32
  }
}

</mosaic_0001>

<llo_original>
// kernel: tpu_custom_call.1
$region0: #{tpu_custom_call.1}
  #allocation0 [shape = 'u32[]', space=smem, size = 0x4, offset = 0x4, fixed_abs, tag = 'smem constant byte address 0x4 - core index']
  #allocation1 [shape = 'u32[72,128]{1,0:T(1,128)}', space=vmem, size = 0x9000, scoped, tag = 'internal scratch']
  %s0 = inlined_call_operand.hbm [shape: bf16[800,256], index: 0, kind: input, shape index: {}]
  %s1 = inlined_call_operand.vmem [shape: bf16[256,32], index: 1, kind: input, shape index: {}]
  %s2 = inlined_call_operand.vmem [shape: f32[1,32], index: 2, kind: input, shape index: {}]
  %s3 = inlined_call_operand.vmem [shape: bf16[800,32], index: 3, kind: output, shape index: {}]
  %s4 = sld [smem:[#allocation0]]
  $region93: #{tpu_custom_call.1} parent=0
    _
  %s6 = ssub.s32 1, %s4
  %s7 = scalar_select 0, %s6, %s4
  $region1: #{tpu_custom_call.1} parent=0
    #allocation2 [shape = 'u8[524288]{0}', space=vmem, size = 0x80000, scoped, tag = 'input window, operand 0']
    #allocation3 [shape = 's32[2]{0}', space=sflag, size = 0x8, scoped, tag = 'scoped memory for tpu_custom_call.1']
    #allocation4 [shape = 'u8[262144]{0}', space=vmem, size = 0x40000, scoped, tag = 'output window, operand 0']
    %8 = vsyncpa [#allocation3], 0
    %s9 = scalar_lea.sflag [#allocation3], 1
    %10 = vsyncpa %s9, 0
    loop: start=0, step=1, limit=4
    $region2: #{tpu_custom_call.1} parent=1 // loop_pre_header
      _
    $region3: #{tpu_custom_call.1} parent=1 // loop_header
      %s12 = sphi 0, %s16
      %p13 = scmp.ge.s32.totalorder %s12, 4
      %s22 = sphi 0, %s24
      %s25 = sphi 0, %s22
      %s26 = sphi 0, %s25
      %s42 = sphi 0, %s26
      %s46 = sphi 0, %s46
      %s48 = sphi 0, %s46
      %s49 = sphi 0, %s48
      %s63 = sphi 0, %s49
      %s67 = sphi 0, %s67
      %s69 = sphi 0, %s67
      %s70 = sphi 0, %s69
      %s84 = sphi 0, %s70
      %s90 = sphi 0, %s92
      %s93 = sphi 0, %s90
      %s94 = sphi 0, %s93
      %s110 = sphi 0, %s94
    $region4: #{tpu_custom_call.1} parent=1 // loop_header_branch
      %15 = sbr.rel (%p13) target = $region8
    $region5: #{tpu_custom_call.1} parent=1 // loop_body
      %s17 = ssub.s32 %s12, 1
      %s18 = ssub.s32 %s12, 2
      %s19 = sadd.s32 %s12, 1
      %s20 = ssub.s32 %s12, %s19
      %p21 = scmp.eq.s32.totalorder %s20, 0
      %s23 = sadd.s32 %s22, 1
      %s24 = scalar_select %p21, %s22, %s23
      %p27 = pneg %p21
      %p28 = scmp.eq.s32.totalorder %s12, 1
      %p29 = por %p27, %p28
      %p30 = scmp.ne.s32.totalorder %s22, %s25
      %p31 = scmp.eq.s32.totalorder %s12, 0
      %p32 = por %p30, %p31
      %p33 = scmp.ne.s32.totalorder %s22, %s25
      %p34 = scmp.eq.s32.totalorder %s17, 1
      %p35 = por %p33, %p34
      %p36 = scmp.ne.s32.totalorder %s25, %s26
      %p37 = scmp.eq.s32.totalorder %s17, 0
      %p38 = por %p36, %p37
      %p39 = scmp.ne.s32.totalorder %s25, %s26
      %p40 = scmp.eq.s32.totalorder %s18, 1
      %p41 = por %p39, %p40
      %p43 = scmp.ne.s32.totalorder %s26, %s42
      %p44 = scmp.eq.s32.totalorder %s18, 0
      %p45 = por %p43, %p44
      %s47 = sadd.s32 %s46, 1
      %p50 = scmp.eq.s32.totalorder %s12, 1
      %p51 = scmp.ne.s32.totalorder %s46, %s48
      %p52 = scmp.eq.s32.totalorder %s12, 0
      %p53 = por %p51, %p52
      %p54 = scmp.ne.s32.totalorder %s46, %s48
      %p55 = scmp.eq.s32.totalorder %s17, 1
      %p56 = por %p54, %p55
      %p57 = scmp.ne.s32.totalorder %s48, %s49
      %p58 = scmp.eq.s32.totalorder %s17, 0
      %p59 = por %p57, %p58
      %p60 = scmp.ne.s32.totalorder %s48, %s49
      %p61 = scmp.eq.s32.totalorder %s18, 1
      %p62 = por %p60, %p61
      %p64 = scmp.ne.s32.totalorder %s49, %s63
      %p65 = scmp.eq.s32.totalorder %s18, 0
      %p66 = por %p64, %p65
      %s68 = sadd.s32 %s67, 1
      %p71 = scmp.eq.s32.totalorder %s12, 1
      %p72 = scmp.ne.s32.totalorder %s67, %s69
      %p73 = scmp.eq.s32.totalorder %s12, 0
      %p74 = por %p72, %p73
      %p75 = scmp.ne.s32.totalorder %s67, %s69
      %p76 = scmp.eq.s32.totalorder %s17, 1
      %p77 = por %p75, %p76
      %p78 = scmp.ne.s32.totalorder %s69, %s70
      %p79 = scmp.eq.s32.totalorder %s17, 0
      %p80 = por %p78, %p79
      %p81 = scmp.ne.s32.totalorder %s69, %s70
      %p82 = scmp.eq.s32.totalorder %s18, 1
      %p83 = por %p81, %p82
      %p85 = scmp.ne.s32.totalorder %s70, %s84
      %p86 = scmp.eq.s32.totalorder %s18, 0
      %p87 = por %p85, %p86
      %s88 = ssub.s32 %s12, %s19
      %p89 = scmp.eq.s32.totalorder %s88, 0
      %s91 = sadd.s32 %s90, 1
      %s92 = scalar_select %p89, %s90, %s91
      %p95 = pneg %p89
      %p96 = scmp.eq.s32.totalorder %s12, 1
      %p97 = por %p95, %p96
      %p98 = scmp.ne.s32.totalorder %s90, %s93
      %p99 = scmp.eq.s32.totalorder %s12, 0
      %p100 = por %p98, %p99
      %p101 = scmp.ne.s32.totalorder %s90, %s93
      %p102 = scmp.eq.s32.totalorder %s17, 1
      %p103 = por %p101, %p102
      %p104 = scmp.ne.s32.totalorder %s93, %s94
      %p105 = scmp.eq.s32.totalorder %s17, 0
      %p106 = por %p104, %p105
      %p107 = scmp.ne.s32.totalorder %s93, %s94
      %p108 = scmp.eq.s32.totalorder %s18, 1
      %p109 = por %p107, %p108
      %p111 = scmp.ne.s32.totalorder %s94, %s110
      %p112 = scmp.eq.s32.totalorder %s18, 0
      %p113 = por %p111, %p112
      %p114 = scmp.le.s32.totalorder 1, %s12
      %p115 = scmp.lt.s32.totalorder %s12, 3
      %p116 = pnand %p114, %p115
      %p117 = pneg %p116
      // Predicated region
      $region9: #{tpu_custom_call.1} parent=5 // pred_check
        _
      $region10: #{tpu_custom_call.1} parent=5 // pred_check_branch
        %119 = sbr.rel (%p116) target = $region12
      $region11: #{tpu_custom_call.1} parent=5 // pred_region
        %s120 = ssub.s32 %s12, 1
        // Predicated region
        $region13: #{tpu_custom_call.1} parent=11 // pred_check
          %p121 = pneg %p59
        $region14: #{tpu_custom_call.1} parent=11 // pred_check_branch
          %123 = sbr.rel (%p121) target = $region16
        $region15: #{tpu_custom_call.1} parent=11 // pred_region
          _
        $region16: #{tpu_custom_call.1} parent=11 // pred_fallthru
          _
        // Predicated region
        $region17: #{tpu_custom_call.1} parent=11 // pred_check
          %p124 = pneg %p80
        $region18: #{tpu_custom_call.1} parent=11 // pred_check_branch
          %126 = sbr.rel (%p124) target = $region20
        $region19: #{tpu_custom_call.1} parent=11 // pred_region
          _
        $region20: #{tpu_custom_call.1} parent=11 // pred_fallthru
          _
      $region12: #{tpu_custom_call.1} parent=5 // pred_fallthru
        _
      %p127 = scmp.lt.s32.totalorder %s12, 2
      // Predicated region
      $region21: #{tpu_custom_call.1} parent=5 // pred_check
        %p128 = pneg %p127
      $region22: #{tpu_custom_call.1} parent=5 // pred_check_branch
        %130 = sbr.rel (%p128) target = $region24
      $region23: #{tpu_custom_call.1} parent=5 // pred_region
        // Predicated region
        $region25: #{tpu_custom_call.1} parent=23 // pred_check
          %p131 = pneg %p32
        $region26: #{tpu_custom_call.1} parent=23 // pred_check_branch
          %133 = sbr.rel (%p131) target = $region28
        $region27: #{tpu_custom_call.1} parent=23 // pred_region
          %s134 = sand.u32 %s22, 1
          %s135 = scalar_lea.sflag [#allocation3], %s134
          %s136 = sand.u32 %s22, 1
          %s137 = smul.addr %s136, 512
          %s138 = scalar_lea.vmem [#allocation2], %s137
          %s139 = smul.u32 64, %s12
          %s140 = ssub.s32 100, %s139
          %p141 = scmp.lt.s32.totalorder %s140, 64
          %s142 = scalar_select %p141, %s140, 64
          %s143 = smul.u32 4, %s142
          %s144 = smul.u32 %s143, 2
          %s145 = ssub.s32 512, %s144
          %s146 = sshll.u32 %s145, 4
          %147 = vsyncadd %s135, %s146
          %p148 = scmp.ne.s32.totalorder 0, %s144
          %s149 = smul.addr %s139, 2
          %s150 = smul.addr %s149, 4
          %s151 = scalar_lea.hbm %s0, %s150
          %s152 = smul.u32 8, %s142
          %s153 = sshll.u32 %s151, 4
          %s154 = int_to_ptr.hbm [resolvable:$true] %s153
          %s155 = sshll.u32 %s138, 4
          %s156 = int_to_ptr.vmem [resolvable:$true] %s155
          %s157 = sshll.u32 %s152, 4
          %161 = dma.hbm_to_vmem [thread:$0]  (%p148), %s154, %s157, %s156, %s135, 128, 128, 8
        $region28: #{tpu_custom_call.1} parent=23 // pred_fallthru
          _
      $region24: #{tpu_custom_call.1} parent=5 // pred_fallthru
        _
      %p162 = scmp.le.s32.totalorder 1, %s12
      %p163 = scmp.lt.s32.totalorder %s12, 3
      %p164 = pnand %p162, %p163
      %p165 = pneg %p164
      // Predicated region
      $region29: #{tpu_custom_call.1} parent=5 // pred_check
        _
      $region30: #{tpu_custom_call.1} parent=5 // pred_check_branch
        %167 = sbr.rel (%p164) target = $region32
      $region31: #{tpu_custom_call.1} parent=5 // pred_region
        %s168 = ssub.s32 %s12, 1
        %s169 = sand.u32 %s25, 1
        %s170 = scalar_lea.sflag [#allocation3], %s169
        %s171 = sand.u32 %s25, 1
        %s172 = smul.addr %s171, 512
        %s173 = scalar_lea.vmem [#allocation2], %s172
        // Predicated region
        $region33: #{tpu_custom_call.1} parent=31 // pred_check
          %p174 = pneg %p38
        $region34: #{tpu_custom_call.1} parent=31 // pred_check_branch
          %176 = sbr.rel (%p174) target = $region36
        $region35: #{tpu_custom_call.1} parent=31 // pred_region
          %178 = dma.done %s170, 8192
        $region36: #{tpu_custom_call.1} parent=31 // pred_fallthru
          _
        %s179 = sand.u32 %s25, 1
        %s180 = scalar_lea.sflag [#allocation3], %s179
        %s181 = sand.u32 %s25, 1
        %s182 = smul.addr %s181, 512
        %s183 = scalar_lea.vmem [#allocation2], %s182
        %p184 = pneg %p38
        %p185 = pneg %p35
        %p186 = pneg %p59
        %p187 = pneg %p56
        %p188 = pneg %p80
        %p189 = pneg %p77
        %p190 = pneg %p106
        %p191 = pneg %p103
        %s192 = sand.u32 %s93, 1
        %s193 = sand.u32 %s93, 1
        %s194 = smul.addr %s193, 256
        %s195 = scalar_lea.vmem [#allocation4], %s194
        %s196 = smul.u32 64, %s17
        %s197 = ssub.s32 100, %s196
        %p198 = scmp.lt.s32.totalorder %s197, 64
        %s199 = scalar_select %p198, %s197, 64
        %s200 = smul.u32 4, %s199
        %s201 = smul.u32 %s200, 2
        %s202 = smul.u32 64, %s17
        %s203 = ssub.s32 100, %s202
        %p204 = scmp.lt.s32.totalorder %s203, 64
        %s205 = scalar_select %p204, %s203, 64
        %s206 = smul.u32 4, %s205
        %v207 = vld [vmem:[%s173] sm:$0xff]
        %v208 = vld [vmem:[%s173 + $0x8] sm:$0xff]
        %v209 = vld [vmem:[%s173 + $0x10] sm:$0xff]
        %v210 = vld [vmem:[%s173 + $0x18] sm:$0xff]
        %v211 = vld [vmem:[%s173 + $0x20] sm:$0xff]
        %v212 = vld [vmem:[%s173 + $0x28] sm:$0xff]
        %v213 = vld [vmem:[%s173 + $0x30] sm:$0xff]
        %v214 = vld [vmem:[%s173 + $0x38] sm:$0xff]
        %v215 = vld [vmem:[%s173 + $0x40] sm:$0xff]
        %v216 = vld [vmem:[%s173 + $0x48] sm:$0xff]
        %v217 = vld [vmem:[%s173 + $0x50] sm:$0xff]
        %v218 = vld [vmem:[%s173 + $0x58] sm:$0xff]
        %v219 = vld [vmem:[%s173 + $0x60] sm:$0xff]
        %v220 = vld [vmem:[%s173 + $0x68] sm:$0xff]
        %v221 = vld [vmem:[%s173 + $0x70] sm:$0xff]
        %v222 = vld [vmem:[%s173 + $0x78] sm:$0xff]
        %v223 = vld [vmem:[%s173 + $0x80] sm:$0xff]
        %v224 = vld [vmem:[%s173 + $0x88] sm:$0xff]
        %v225 = vld [vmem:[%s173 + $0x90] sm:$0xff]
        %v226 = vld [vmem:[%s173 + $0x98] sm:$0xff]
        %v227 = vld [vmem:[%s173 + $0xa0] sm:$0xff]
        %v228 = vld [vmem:[%s173 + $0xa8] sm:$0xff]
        %v229 = vld [vmem:[%s173 + $0xb0] sm:$0xff]
        %v230 = vld [vmem:[%s173 + $0xb8] sm:$0xff]
        %v231 = vld [vmem:[%s173 + $0xc0] sm:$0xff]
        %v232 = vld [vmem:[%s173 + $0xc8] sm:$0xff]
        %v233 = vld [vmem:[%s173 + $0xd0] sm:$0xff]
        %v234 = vld [vmem:[%s173 + $0xd8] sm:$0xff]
        %v235 = vld [vmem:[%s173 + $0xe0] sm:$0xff]
        %v236 = vld [vmem:[%s173 + $0xe8] sm:$0xff]
        %v237 = vld [vmem:[%s173 + $0xf0] sm:$0xff]
        %v238 = vld [vmem:[%s173 + $0xf8] sm:$0xff]
        %v239 = vld [vmem:[%s173 + $0x100] sm:$0xff]
        %v240 = vld [vmem:[%s173 + $0x108] sm:$0xff]
        %v241 = vld [vmem:[%s173 + $0x110] sm:$0xff]
        %v242 = vld [vmem:[%s173 + $0x118] sm:$0xff]
        %v243 = vld [vmem:[%s173 + $0x120] sm:$0xff]
        %v244 = vld [vmem:[%s173 + $0x128] sm:$0xff]
        %v245 = vld [vmem:[%s173 + $0x130] sm:$0xff]
        %v246 = vld [vmem:[%s173 + $0x138] sm:$0xff]
        %v247 = vld [vmem:[%s173 + $0x140] sm:$0xff]
        %v248 = vld [vmem:[%s173 + $0x148] sm:$0xff]
        %v249 = vld [vmem:[%s173 + $0x150] sm:$0xff]
        %v250 = vld [vmem:[%s173 + $0x158] sm:$0xff]
        %v251 = vld [vmem:[%s173 + $0x160] sm:$0xff]
        %v252 = vld [vmem:[%s173 + $0x168] sm:$0xff]
        %v253 = vld [vmem:[%s173 + $0x170] sm:$0xff]
        %v254 = vld [vmem:[%s173 + $0x178] sm:$0xff]
        %v255 = vld [vmem:[%s173 + $0x180] sm:$0xff]
        %v256 = vld [vmem:[%s173 + $0x188] sm:$0xff]
        %v257 = vld [vmem:[%s173 + $0x190] sm:$0xff]
        %v258 = vld [vmem:[%s173 + $0x198] sm:$0xff]
        %v259 = vld [vmem:[%s173 + $0x1a0] sm:$0xff]
        %v260 = vld [vmem:[%s173 + $0x1a8] sm:$0xff]
        %v261 = vld [vmem:[%s173 + $0x1b0] sm:$0xff]
        %v262 = vld [vmem:[%s173 + $0x1b8] sm:$0xff]
        %v263 = vld [vmem:[%s173 + $0x1c0] sm:$0xff]
        %v264 = vld [vmem:[%s173 + $0x1c8] sm:$0xff]
        %v265 = vld [vmem:[%s173 + $0x1d0] sm:$0xff]
        %v266 = vld [vmem:[%s173 + $0x1d8] sm:$0xff]
        %v267 = vld [vmem:[%s173 + $0x1e0] sm:$0xff]
        %v268 = vld [vmem:[%s173 + $0x1e8] sm:$0xff]
        %v269 = vld [vmem:[%s173 + $0x1f0] sm:$0xff]
        %v270 = vld [vmem:[%s173 + $0x1f8] sm:$0xff]
        %v271 = vld [vmem:[%s1] sm:$0xf]
        %v272 = vld [vmem:[%s1 + $0x4] sm:$0xf]
        %v273 = vld [vmem:[%s1 + $0x8] sm:$0xf]
        %v274 = vld [vmem:[%s1 + $0xc] sm:$0xf]
        %v275 = vld [vmem:[%s1 + $0x10] sm:$0xf]
        %v276 = vld [vmem:[%s1 + $0x14] sm:$0xf]
        %v277 = vld [vmem:[%s1 + $0x18] sm:$0xf]
        %v278 = vld [vmem:[%s1 + $0x1c] sm:$0xf]
        %v279 = vld [vmem:[%s1 + $0x20] sm:$0xf]
        %v280 = vld [vmem:[%s1 + $0x24] sm:$0xf]
        %v281 = vld [vmem:[%s1 + $0x28] sm:$0xf]
        %v282 = vld [vmem:[%s1 + $0x2c] sm:$0xf]
        %v283 = vld [vmem:[%s1 + $0x30] sm:$0xf]
        %v284 = vld [vmem:[%s1 + $0x34] sm:$0xf]
        %v285 = vld [vmem:[%s1 + $0x38] sm:$0xf]
        %v286 = vld [vmem:[%s1 + $0x3c] sm:$0xf]
        %v287 = vld [vmem:[%s1 + $0x40] sm:$0xf]
        %v288 = vld [vmem:[%s1 + $0x44] sm:$0xf]
        %v289 = vld [vmem:[%s1 + $0x48] sm:$0xf]
        %v290 = vld [vmem:[%s1 + $0x4c] sm:$0xf]
        %v291 = vld [vmem:[%s1 + $0x50] sm:$0xf]
        %v292 = vld [vmem:[%s1 + $0x54] sm:$0xf]
        %v293 = vld [vmem:[%s1 + $0x58] sm:$0xf]
        %v294 = vld [vmem:[%s1 + $0x5c] sm:$0xf]
        %v295 = vld [vmem:[%s1 + $0x60] sm:$0xf]
        %v296 = vld [vmem:[%s1 + $0x64] sm:$0xf]
        %v297 = vld [vmem:[%s1 + $0x68] sm:$0xf]
        %v298 = vld [vmem:[%s1 + $0x6c] sm:$0xf]
        %v299 = vld [vmem:[%s1 + $0x70] sm:$0xf]
        %v300 = vld [vmem:[%s1 + $0x74] sm:$0xf]
        %v301 = vld [vmem:[%s1 + $0x78] sm:$0xf]
        %v302 = vld [vmem:[%s1 + $0x7c] sm:$0xf]
        %v303 = vld [vmem:[%s2] sm:$0x1]
        %v305 = vperm.slane %v303, 0
        %v371 = vunpack.c.l.b16 %v207
        %v372 = vunpack.c.h.b16 %v207
        %v373 = vunpack.c.l.b16 %v208
        %v374 = vunpack.c.h.b16 %v208
        %v375 = vunpack.c.l.b16 %v209
        %v376 = vunpack.c.h.b16 %v209
        %v377 = vunpack.c.l.b16 %v210
        %v378 = vunpack.c.h.b16 %v210
        %v379 = vunpack.c.l.b16 %v211
        %v380 = vunpack.c.h.b16 %v211
        %v381 = vunpack.c.l.b16 %v212
        %v382 = vunpack.c.h.b16 %v212
        %v383 = vunpack.c.l.b16 %v213
        %v384 = vunpack.c.h.b16 %v213
        %v385 = vunpack.c.l.b16 %v214
        %v386 = vunpack.c.h.b16 %v214
        %v387 = vunpack.c.l.b16 %v215
        %v388 = vunpack.c.h.b16 %v215
        %v389 = vunpack.c.l.b16 %v216
        %v390 = vunpack.c.h.b16 %v216
        %v391 = vunpack.c.l.b16 %v217
        %v392 = vunpack.c.h.b16 %v217
        %v393 = vunpack.c.l.b16 %v218
        %v394 = vunpack.c.h.b16 %v218
        %v395 = vunpack.c.l.b16 %v219
        %v396 = vunpack.c.h.b16 %v219
        %v397 = vunpack.c.l.b16 %v220
        %v398 = vunpack.c.h.b16 %v220
        %v399 = vunpack.c.l.b16 %v221
        %v400 = vunpack.c.h.b16 %v221
        %v401 = vunpack.c.l.b16 %v222
        %v402 = vunpack.c.h.b16 %v222
        %v403 = vunpack.c.l.b16 %v223
        %v404 = vunpack.c.h.b16 %v223
        %v405 = vunpack.c.l.b16 %v224
        %v406 = vunpack.c.h.b16 %v224
        %v407 = vunpack.c.l.b16 %v225
        %v408 = vunpack.c.h.b16 %v225
        %v409 = vunpack.c.l.b16 %v226
        %v410 = vunpack.c.h.b16 %v226
        %v411 = vunpack.c.l.b16 %v227
        %v412 = vunpack.c.h.b16 %v227
        %v413 = vunpack.c.l.b16 %v228
        %v414 = vunpack.c.h.b16 %v228
        %v415 = vunpack.c.l.b16 %v229
        %v416 = vunpack.c.h.b16 %v229
        %v417 = vunpack.c.l.b16 %v230
        %v418 = vunpack.c.h.b16 %v230
        %v419 = vunpack.c.l.b16 %v231
        %v420 = vunpack.c.h.b16 %v231
        %v421 = vunpack.c.l.b16 %v232
        %v422 = vunpack.c.h.b16 %v232
        %v423 = vunpack.c.l.b16 %v233
        %v424 = vunpack.c.h.b16 %v233
        %v425 = vunpack.c.l.b16 %v234
        %v426 = vunpack.c.h.b16 %v234
        %v427 = vunpack.c.l.b16 %v235
        %v428 = vunpack.c.h.b16 %v235
        %v429 = vunpack.c.l.b16 %v236
        %v430 = vunpack.c.h.b16 %v236
        %v431 = vunpack.c.l.b16 %v237
        %v432 = vunpack.c.h.b16 %v237
        %v433 = vunpack.c.l.b16 %v238
        %v434 = vunpack.c.h.b16 %v238
        %v435 = vunpack.c.l.b16 %v239
        %v436 = vunpack.c.h.b16 %v239
        %v437 = vunpack.c.l.b16 %v240
        %v438 = vunpack.c.h.b16 %v240
        %v439 = vunpack.c.l.b16 %v241
        %v440 = vunpack.c.h.b16 %v241
        %v441 = vunpack.c.l.b16 %v242
        %v442 = vunpack.c.h.b16 %v242
        %v443 = vunpack.c.l.b16 %v243
        %v444 = vunpack.c.h.b16 %v243
        %v445 = vunpack.c.l.b16 %v244
        %v446 = vunpack.c.h.b16 %v244
        %v447 = vunpack.c.l.b16 %v245
        %v448 = vunpack.c.h.b16 %v245
        %v449 = vunpack.c.l.b16 %v246
        %v450 = vunpack.c.h.b16 %v246
        %v451 = vunpack.c.l.b16 %v247
        %v452 = vunpack.c.h.b16 %v247
        %v453 = vunpack.c.l.b16 %v248
        %v454 = vunpack.c.h.b16 %v248
        %v455 = vunpack.c.l.b16 %v249
        %v456 = vunpack.c.h.b16 %v249
        %v457 = vunpack.c.l.b16 %v250
        %v458 = vunpack.c.h.b16 %v250
        %v459 = vunpack.c.l.b16 %v251
        %v460 = vunpack.c.h.b16 %v251
        %v461 = vunpack.c.l.b16 %v252
        %v462 = vunpack.c.h.b16 %v252
        %v463 = vunpack.c.l.b16 %v253
        %v464 = vunpack.c.h.b16 %v253
        %v465 = vunpack.c.l.b16 %v254
        %v466 = vunpack.c.h.b16 %v254
        %v467 = vunpack.c.l.b16 %v255
        %v468 = vunpack.c.h.b16 %v255
        %v469 = vunpack.c.l.b16 %v256
        %v470 = vunpack.c.h.b16 %v256
        %v471 = vunpack.c.l.b16 %v257
        %v472 = vunpack.c.h.b16 %v257
        %v473 = vunpack.c.l.b16 %v258
        %v474 = vunpack.c.h.b16 %v258
        %v475 = vunpack.c.l.b16 %v259
        %v476 = vunpack.c.h.b16 %v259
        %v477 = vunpack.c.l.b16 %v260
        %v478 = vunpack.c.h.b16 %v260
        %v479 = vunpack.c.l.b16 %v261
        %v480 = vunpack.c.h.b16 %v261
        %v481 = vunpack.c.l.b16 %v262
        %v482 = vunpack.c.h.b16 %v262
        %v483 = vunpack.c.l.b16 %v263
        %v484 = vunpack.c.h.b16 %v263
        %v485 = vunpack.c.l.b16 %v264
        %v486 = vunpack.c.h.b16 %v264
        %v487 = vunpack.c.l.b16 %v265
        %v488 = vunpack.c.h.b16 %v265
        %v489 = vunpack.c.l.b16 %v266
        %v490 = vunpack.c.h.b16 %v266
        %v491 = vunpack.c.l.b16 %v267
        %v492 = vunpack.c.h.b16 %v267
        %v493 = vunpack.c.l.b16 %v268
        %v494 = vunpack.c.h.b16 %v268
        %v495 = vunpack.c.l.b16 %v269
        %v496 = vunpack.c.h.b16 %v269
        %v497 = vunpack.c.l.b16 %v270
        %v498 = vunpack.c.h.b16 %v270
        %v499 = vpack.c.b16 %v373, %v371
        %v500 = vpack.c.b16 %v374, %v372
        %v501 = vpack.c.b16 %v377, %v375
        %v502 = vpack.c.b16 %v378, %v376
        %v503 = vpack.c.b16 %v381, %v379
        %v504 = vpack.c.b16 %v382, %v380
        %v505 = vpack.c.b16 %v385, %v383
        %v506 = vpack.c.b16 %v386, %v384
        %v507 = vpack.c.b16 %v389, %v387
        %v508 = vpack.c.b16 %v390, %v388
        %v509 = vpack.c.b16 %v393, %v391
        %v510 = vpack.c.b16 %v394, %v392
        %v511 = vpack.c.b16 %v397, %v395
        %v512 = vpack.c.b16 %v398, %v396
        %v513 = vpack.c.b16 %v401, %v399
        %v514 = vpack.c.b16 %v402, %v400
        %v515 = vpack.c.b16 %v405, %v403
        %v516 = vpack.c.b16 %v406, %v404
        %v517 = vpack.c.b16 %v409, %v407
        %v518 = vpack.c.b16 %v410, %v408
        %v519 = vpack.c.b16 %v413, %v411
        %v520 = vpack.c.b16 %v414, %v412
        %v521 = vpack.c.b16 %v417, %v415
        %v522 = vpack.c.b16 %v418, %v416
        %v523 = vpack.c.b16 %v421, %v419
        %v524 = vpack.c.b16 %v422, %v420
        %v525 = vpack.c.b16 %v425, %v423
        %v526 = vpack.c.b16 %v426, %v424
        %v527 = vpack.c.b16 %v429, %v427
        %v528 = vpack.c.b16 %v430, %v428
        %v529 = vpack.c.b16 %v433, %v431
        %v530 = vpack.c.b16 %v434, %v432
        %v531 = vpack.c.b16 %v437, %v435
        %v532 = vpack.c.b16 %v438, %v436
        %v533 = vpack.c.b16 %v441, %v439
        %v534 = vpack.c.b16 %v442, %v440
        %v535 = vpack.c.b16 %v445, %v443
        %v536 = vpack.c.b16 %v446, %v444
        %v537 = vpack.c.b16 %v449, %v447
        %v538 = vpack.c.b16 %v450, %v448
        %v539 = vpack.c.b16 %v453, %v451
        %v540 = vpack.c.b16 %v454, %v452
        %v541 = vpack.c.b16 %v457, %v455
        %v542 = vpack.c.b16 %v458, %v456
        %v543 = vpack.c.b16 %v461, %v459
        %v544 = vpack.c.b16 %v462, %v460
        %v545 = vpack.c.b16 %v465, %v463
        %v546 = vpack.c.b16 %v466, %v464
        %v547 = vpack.c.b16 %v469, %v467
        %v548 = vpack.c.b16 %v470, %v468
        %v549 = vpack.c.b16 %v473, %v471
        %v550 = vpack.c.b16 %v474, %v472
        %v551 = vpack.c.b16 %v477, %v475
        %v552 = vpack.c.b16 %v478, %v476
        %v553 = vpack.c.b16 %v481, %v479
        %v554 = vpack.c.b16 %v482, %v480
        %v555 = vpack.c.b16 %v485, %v483
        %v556 = vpack.c.b16 %v486, %v484
        %v557 = vpack.c.b16 %v489, %v487
        %v558 = vpack.c.b16 %v490, %v488
        %v559 = vpack.c.b16 %v493, %v491
        %v560 = vpack.c.b16 %v494, %v492
        %v561 = vpack.c.b16 %v497, %v495
        %v562 = vpack.c.b16 %v498, %v496
        %v659 = vunpack.c.l.b16 %v271
        %v660 = vunpack.c.l.b16 %v272
        %v661 = vunpack.c.l.b16 %v273
        %v662 = vunpack.c.l.b16 %v274
        %v663 = vunpack.c.l.b16 %v275
        %v664 = vunpack.c.l.b16 %v276
        %v665 = vunpack.c.l.b16 %v277
        %v666 = vunpack.c.l.b16 %v278
        %v667 = vunpack.c.l.b16 %v279
        %v668 = vunpack.c.l.b16 %v280
        %v669 = vunpack.c.l.b16 %v281
        %v670 = vunpack.c.l.b16 %v282
        %v671 = vunpack.c.l.b16 %v283
        %v672 = vunpack.c.l.b16 %v284
        %v673 = vunpack.c.l.b16 %v285
        %v674 = vunpack.c.l.b16 %v286
        %v675 = vunpack.c.l.b16 %v287
        %v676 = vunpack.c.l.b16 %v288
        %v677 = vunpack.c.l.b16 %v289
        %v678 = vunpack.c.l.b16 %v290
        %v679 = vunpack.c.l.b16 %v291
        %v680 = vunpack.c.l.b16 %v292
        %v681 = vunpack.c.l.b16 %v293
        %v682 = vunpack.c.l.b16 %v294
        %v683 = vunpack.c.l.b16 %v295
        %v684 = vunpack.c.l.b16 %v296
        %v685 = vunpack.c.l.b16 %v297
        %v686 = vunpack.c.l.b16 %v298
        %v687 = vunpack.c.l.b16 %v299
        %v688 = vunpack.c.l.b16 %v300
        %v689 = vunpack.c.l.b16 %v301
        %v690 = vunpack.c.l.b16 %v302
        %v691 = vpack.c.b16 %v660, %v659
        %v692 = vpack.c.b16 %v662, %v661
        %v693 = vpack.c.b16 %v664, %v663
        %v694 = vpack.c.b16 %v666, %v665
        %v695 = vpack.c.b16 %v668, %v667
        %v696 = vpack.c.b16 %v670, %v669
        %v697 = vpack.c.b16 %v672, %v671
        %v698 = vpack.c.b16 %v674, %v673
        %v699 = vpack.c.b16 %v676, %v675
        %v700 = vpack.c.b16 %v678, %v677
        %v701 = vpack.c.b16 %v680, %v679
        %v702 = vpack.c.b16 %v682, %v681
        %v703 = vpack.c.b16 %v684, %v683
        %v704 = vpack.c.b16 %v686, %v685
        %v705 = vpack.c.b16 %v688, %v687
        %v706 = vpack.c.b16 %v690, %v689
        %723 = vmatpush.bf16.msra.mxu0 %v698
        %724 = vmatpush.bf16.msra.mxu0 %v697
        %725 = vmatpush.bf16.msra.mxu0 %v696
        %726 = vmatpush.bf16.msra.mxu0 %v695
        %727 = vmatpush.bf16.msra.mxu0 %v694
        %728 = vmatpush.bf16.msra.mxu0 %v693
        %729 = vmatpush.bf16.msra.mxu0 %v692
        %730 = vmatpush.bf16.msra.mxu0 %v691
        %731 = vmatmul.bf16.gmra.mxu0 %v499
        %v732 = vpop.f32.mrf.mxu0
        %v733 = vadd.f32 %v305, %v732
        %v734 = vpop.f32.mrf.mxu0
        %v735 = vadd.f32 %v305, %v734
        %736 = vmatmul.bf16.gmra.mxu0 %v501
        %v737 = vpop.f32.mrf.mxu0
        %v738 = vadd.f32 %v305, %v737
        %v739 = vpop.f32.mrf.mxu0
        %v740 = vadd.f32 %v305, %v739
        %741 = vmatmul.bf16.gmra.mxu0 %v503
        %v742 = vpop.f32.mrf.mxu0
        %v743 = vadd.f32 %v305, %v742
        %v744 = vpop.f32.mrf.mxu0
        %v745 = vadd.f32 %v305, %v744
        %746 = vmatmul.bf16.gmra.mxu0 %v505
        %v747 = vpop.f32.mrf.mxu0
        %v748 = vadd.f32 %v305, %v747
        %v749 = vpop.f32.mrf.mxu0
        %v750 = vadd.f32 %v305, %v749
        %751 = vmatmul.bf16.gmra.mxu0 %v507
        %v752 = vpop.f32.mrf.mxu0
        %v753 = vadd.f32 %v305, %v752
        %v754 = vpop.f32.mrf.mxu0
        %v755 = vadd.f32 %v305, %v754
        %756 = vmatmul.bf16.gmra.mxu0 %v509
        %v757 = vpop.f32.mrf.mxu0
        %v758 = vadd.f32 %v305, %v757
        %v759 = vpop.f32.mrf.mxu0
        %v760 = vadd.f32 %v305, %v759
        %761 = vmatmul.bf16.gmra.mxu0 %v511
        %v762 = vpop.f32.mrf.mxu0
        %v763 = vadd.f32 %v305, %v762
        %v764 = vpop.f32.mrf.mxu0
        %v765 = vadd.f32 %v305, %v764
        %766 = vmatmul.bf16.gmra.mxu0 %v513
        %v767 = vpop.f32.mrf.mxu0
        %v768 = vadd.f32 %v305, %v767
        %v769 = vpop.f32.mrf.mxu0
        %v770 = vadd.f32 %v305, %v769
        %771 = vmatmul.bf16.gmra.mxu0 %v515
        %v772 = vpop.f32.mrf.mxu0
        %v773 = vadd.f32 %v305, %v772
        %v774 = vpop.f32.mrf.mxu0
        %v775 = vadd.f32 %v305, %v774
        %776 = vmatmul.bf16.gmra.mxu0 %v517
        %v777 = vpop.f32.mrf.mxu0
        %v778 = vadd.f32 %v305, %v777
        %v779 = vpop.f32.mrf.mxu0
        %v780 = vadd.f32 %v305, %v779
        %781 = vmatmul.bf16.gmra.mxu0 %v519
        %v782 = vpop.f32.mrf.mxu0
        %v783 = vadd.f32 %v305, %v782
        %v784 = vpop.f32.mrf.mxu0
        %v785 = vadd.f32 %v305, %v784
        %786 = vmatmul.bf16.gmra.mxu0 %v521
        %v787 = vpop.f32.mrf.mxu0
        %v788 = vadd.f32 %v305, %v787
        %v789 = vpop.f32.mrf.mxu0
        %v790 = vadd.f32 %v305, %v789
        %791 = vmatmul.bf16.gmra.mxu0 %v523
        %v792 = vpop.f32.mrf.mxu0
        %v793 = vadd.f32 %v305, %v792
        %v794 = vpop.f32.mrf.mxu0
        %v795 = vadd.f32 %v305, %v794
        %796 = vmatmul.bf16.gmra.mxu0 %v525
        %v797 = vpop.f32.mrf.mxu0
        %v798 = vadd.f32 %v305, %v797
        %v799 = vpop.f32.mrf.mxu0
        %v800 = vadd.f32 %v305, %v799
        %801 = vmatmul.bf16.gmra.mxu0 %v527
        %v802 = vpop.f32.mrf.mxu0
        %v803 = vadd.f32 %v305, %v802
        %v804 = vpop.f32.mrf.mxu0
        %v805 = vadd.f32 %v305, %v804
        %806 = vmatmul.bf16.gmra.mxu0 %v529
        %v807 = vpop.f32.mrf.mxu0
        %v808 = vadd.f32 %v305, %v807
        %v809 = vpop.f32.mrf.mxu0
        %v810 = vadd.f32 %v305, %v809
        %811 = vmatmul.bf16.gmra.mxu0 %v531
        %v812 = vpop.f32.mrf.mxu0
        %v813 = vadd.f32 %v305, %v812
        %v814 = vpop.f32.mrf.mxu0
        %v815 = vadd.f32 %v305, %v814
        %816 = vmatmul.bf16.gmra.mxu0 %v533
        %v817 = vpop.f32.mrf.mxu0
        %v818 = vadd.f32 %v305, %v817
        %v819 = vpop.f32.mrf.mxu0
        %v820 = vadd.f32 %v305, %v819
        %821 = vmatmul.bf16.gmra.mxu0 %v535
        %v822 = vpop.f32.mrf.mxu0
        %v823 = vadd.f32 %v305, %v822
        %v824 = vpop.f32.mrf.mxu0
        %v825 = vadd.f32 %v305, %v824
        %826 = vmatmul.bf16.gmra.mxu0 %v537
        %v827 = vpop.f32.mrf.mxu0
        %v828 = vadd.f32 %v305, %v827
        %v829 = vpop.f32.mrf.mxu0
        %v830 = vadd.f32 %v305, %v829
        %831 = vmatmul.bf16.gmra.mxu0 %v539
        %v832 = vpop.f32.mrf.mxu0
        %v833 = vadd.f32 %v305, %v832
        %v834 = vpop.f32.mrf.mxu0
        %v835 = vadd.f32 %v305, %v834
        %836 = vmatmul.bf16.gmra.mxu0 %v541
        %v837 = vpop.f32.mrf.mxu0
        %v838 = vadd.f32 %v305, %v837
        %v839 = vpop.f32.mrf.mxu0
        %v840 = vadd.f32 %v305, %v839
        %841 = vmatmul.bf16.gmra.mxu0 %v543
        %v842 = vpop.f32.mrf.mxu0
        %v843 = vadd.f32 %v305, %v842
        %v844 = vpop.f32.mrf.mxu0
        %v845 = vadd.f32 %v305, %v844
        %846 = vmatmul.bf16.gmra.mxu0 %v545
        %v847 = vpop.f32.mrf.mxu0
        %v848 = vadd.f32 %v305, %v847
        %v849 = vpop.f32.mrf.mxu0
        %v850 = vadd.f32 %v305, %v849
        %851 = vmatmul.bf16.gmra.mxu0 %v547
        %v852 = vpop.f32.mrf.mxu0
        %v853 = vadd.f32 %v305, %v852
        %v854 = vpop.f32.mrf.mxu0
        %v855 = vadd.f32 %v305, %v854
        %856 = vmatmul.bf16.gmra.mxu0 %v549
        %v857 = vpop.f32.mrf.mxu0
        %v858 = vadd.f32 %v305, %v857
        %v859 = vpop.f32.mrf.mxu0
        %v860 = vadd.f32 %v305, %v859
        %861 = vmatmul.bf16.gmra.mxu0 %v551
        %v862 = vpop.f32.mrf.mxu0
        %v863 = vadd.f32 %v305, %v862
        %v864 = vpop.f32.mrf.mxu0
        %v865 = vadd.f32 %v305, %v864
        %866 = vmatmul.bf16.gmra.mxu0 %v553
        %v867 = vpop.f32.mrf.mxu0
        %v868 = vadd.f32 %v305, %v867
        %v869 = vpop.f32.mrf.mxu0
        %v870 = vadd.f32 %v305, %v869
        %871 = vmatmul.bf16.gmra.mxu0 %v555
        %v872 = vpop.f32.mrf.mxu0
        %v873 = vadd.f32 %v305, %v872
        %v874 = vpop.f32.mrf.mxu0
        %v875 = vadd.f32 %v305, %v874
        %876 = vmatmul.bf16.gmra.mxu0 %v557
        %v877 = vpop.f32.mrf.mxu0
        %v878 = vadd.f32 %v305, %v877
        %v879 = vpop.f32.mrf.mxu0
        %v880 = vadd.f32 %v305, %v879
        %881 = vmatmul.bf16.gmra.mxu0 %v559
        %v882 = vpop.f32.mrf.mxu0
        %v883 = vadd.f32 %v305, %v882
        %v884 = vpop.f32.mrf.mxu0
        %v885 = vadd.f32 %v305, %v884
        %886 = vmatmul.bf16.gmra.mxu0 %v561
        %v887 = vpop.f32.mrf.mxu0
        %v888 = vadd.f32 %v305, %v887
        %v889 = vpop.f32.mrf.mxu0
        %v890 = vadd.f32 %v305, %v889
        %891 = vdwg.mxu0
        %892 = vmatpush.bf16.msra.mxu0 %v706
        %893 = vmatpush.bf16.msra.mxu0 %v705
        %894 = vmatpush.bf16.msra.mxu0 %v704
        %895 = vmatpush.bf16.msra.mxu0 %v703
        %896 = vmatpush.bf16.msra.mxu0 %v702
        %897 = vmatpush.bf16.msra.mxu0 %v701
        %898 = vmatpush.bf16.msra.mxu0 %v700
        %899 = vmatpush.bf16.msra.mxu0 %v699
        %900 = vmatmul.bf16.gmra.mxu0 %v500
        %v901 = vpop.f32.mrf.mxu0
        %v902 = vadd.f32 %v733, %v901
        %v903 = vpop.f32.mrf.mxu0
        %v904 = vadd.f32 %v735, %v903
        %905 = vmatmul.bf16.gmra.mxu0 %v502
        %v906 = vpop.f32.mrf.mxu0
        %v907 = vadd.f32 %v738, %v906
        %v908 = vpop.f32.mrf.mxu0
        %v909 = vadd.f32 %v740, %v908
        %910 = vmatmul.bf16.gmra.mxu0 %v504
        %v911 = vpop.f32.mrf.mxu0
        %v912 = vadd.f32 %v743, %v911
        %v913 = vpop.f32.mrf.mxu0
        %v914 = vadd.f32 %v745, %v913
        %915 = vmatmul.bf16.gmra.mxu0 %v506
        %v916 = vpop.f32.mrf.mxu0
        %v917 = vadd.f32 %v748, %v916
        %v918 = vpop.f32.mrf.mxu0
        %v919 = vadd.f32 %v750, %v918
        %920 = vmatmul.bf16.gmra.mxu0 %v508
        %v921 = vpop.f32.mrf.mxu0
        %v922 = vadd.f32 %v753, %v921
        %v923 = vpop.f32.mrf.mxu0
        %v924 = vadd.f32 %v755, %v923
        %925 = vmatmul.bf16.gmra.mxu0 %v510
        %v926 = vpop.f32.mrf.mxu0
        %v927 = vadd.f32 %v758, %v926
        %v928 = vpop.f32.mrf.mxu0
        %v929 = vadd.f32 %v760, %v928
        %930 = vmatmul.bf16.gmra.mxu0 %v512
        %v931 = vpop.f32.mrf.mxu0
        %v932 = vadd.f32 %v763, %v931
        %v933 = vpop.f32.mrf.mxu0
        %v934 = vadd.f32 %v765, %v933
        %935 = vmatmul.bf16.gmra.mxu0 %v514
        %v936 = vpop.f32.mrf.mxu0
        %v937 = vadd.f32 %v768, %v936
        %v938 = vpop.f32.mrf.mxu0
        %v939 = vadd.f32 %v770, %v938
        %940 = vmatmul.bf16.gmra.mxu0 %v516
        %v941 = vpop.f32.mrf.mxu0
        %v942 = vadd.f32 %v773, %v941
        %v943 = vpop.f32.mrf.mxu0
        %v944 = vadd.f32 %v775, %v943
        %945 = vmatmul.bf16.gmra.mxu0 %v518
        %v946 = vpop.f32.mrf.mxu0
        %v947 = vadd.f32 %v778, %v946
        %v948 = vpop.f32.mrf.mxu0
        %v949 = vadd.f32 %v780, %v948
        %950 = vmatmul.bf16.gmra.mxu0 %v520
        %v951 = vpop.f32.mrf.mxu0
        %v952 = vadd.f32 %v783, %v951
        %v953 = vpop.f32.mrf.mxu0
        %v954 = vadd.f32 %v785, %v953
        %955 = vmatmul.bf16.gmra.mxu0 %v522
        %v956 = vpop.f32.mrf.mxu0
        %v957 = vadd.f32 %v788, %v956
        %v958 = vpop.f32.mrf.mxu0
        %v959 = vadd.f32 %v790, %v958
        %960 = vmatmul.bf16.gmra.mxu0 %v524
        %v961 = vpop.f32.mrf.mxu0
        %v962 = vadd.f32 %v793, %v961
        %v963 = vpop.f32.mrf.mxu0
        %v964 = vadd.f32 %v795, %v963
        %965 = vmatmul.bf16.gmra.mxu0 %v526
        %v966 = vpop.f32.mrf.mxu0
        %v967 = vadd.f32 %v798, %v966
        %v968 = vpop.f32.mrf.mxu0
        %v969 = vadd.f32 %v800, %v968
        %970 = vmatmul.bf16.gmra.mxu0 %v528
        %v971 = vpop.f32.mrf.mxu0
        %v972 = vadd.f32 %v803, %v971
        %v973 = vpop.f32.mrf.mxu0
        %v974 = vadd.f32 %v805, %v973
        %975 = vmatmul.bf16.gmra.mxu0 %v530
        %v976 = vpop.f32.mrf.mxu0
        %v977 = vadd.f32 %v808, %v976
        %v978 = vpop.f32.mrf.mxu0
        %v979 = vadd.f32 %v810, %v978
        %980 = vmatmul.bf16.gmra.mxu0 %v532
        %v981 = vpop.f32.mrf.mxu0
        %v982 = vadd.f32 %v813, %v981
        %v983 = vpop.f32.mrf.mxu0
        %v984 = vadd.f32 %v815, %v983
        %985 = vmatmul.bf16.gmra.mxu0 %v534
        %v986 = vpop.f32.mrf.mxu0
        %v987 = vadd.f32 %v818, %v986
        %v988 = vpop.f32.mrf.mxu0
        %v989 = vadd.f32 %v820, %v988
        %990 = vmatmul.bf16.gmra.mxu0 %v536
        %v991 = vpop.f32.mrf.mxu0
        %v992 = vadd.f32 %v823, %v991
        %v993 = vpop.f32.mrf.mxu0
        %v994 = vadd.f32 %v825, %v993
        %995 = vmatmul.bf16.gmra.mxu0 %v538
        %v996 = vpop.f32.mrf.mxu0
        %v997 = vadd.f32 %v828, %v996
        %v998 = vpop.f32.mrf.mxu0
        %v999 = vadd.f32 %v830, %v998
        %1000 = vmatmul.bf16.gmra.mxu0 %v540
        %v1001 = vpop.f32.mrf.mxu0
        %v1002 = vadd.f32 %v833, %v1001
        %v1003 = vpop.f32.mrf.mxu0
        %v1004 = vadd.f32 %v835, %v1003
        %1005 = vmatmul.bf16.gmra.mxu0 %v542
        %v1006 = vpop.f32.mrf.mxu0
        %v1007 = vadd.f32 %v838, %v1006
        %v1008 = vpop.f32.mrf.mxu0
        %v1009 = vadd.f32 %v840, %v1008
        %1010 = vmatmul.bf16.gmra.mxu0 %v544
        %v1011 = vpop.f32.mrf.mxu0
        %v1012 = vadd.f32 %v843, %v1011
        %v1013 = vpop.f32.mrf.mxu0
        %v1014 = vadd.f32 %v845, %v1013
        %1015 = vmatmul.bf16.gmra.mxu0 %v546
        %v1016 = vpop.f32.mrf.mxu0
        %v1017 = vadd.f32 %v848, %v1016
        %v1018 = vpop.f32.mrf.mxu0
        %v1019 = vadd.f32 %v850, %v1018
        %1020 = vmatmul.bf16.gmra.mxu0 %v548
        %v1021 = vpop.f32.mrf.mxu0
        %v1022 = vadd.f32 %v853, %v1021
        %v1023 = vpop.f32.mrf.mxu0
        %v1024 = vadd.f32 %v855, %v1023
        %1025 = vmatmul.bf16.gmra.mxu0 %v550
        %v1026 = vpop.f32.mrf.mxu0
        %v1027 = vadd.f32 %v858, %v1026
        %v1028 = vpop.f32.mrf.mxu0
        %v1029 = vadd.f32 %v860, %v1028
        %1030 = vmatmul.bf16.gmra.mxu0 %v552
        %v1031 = vpop.f32.mrf.mxu0
        %v1032 = vadd.f32 %v863, %v1031
        %v1033 = vpop.f32.mrf.mxu0
        %v1034 = vadd.f32 %v865, %v1033
        %1035 = vmatmul.bf16.gmra.mxu0 %v554
        %v1036 = vpop.f32.mrf.mxu0
        %v1037 = vadd.f32 %v868, %v1036
        %v1038 = vpop.f32.mrf.mxu0
        %v1039 = vadd.f32 %v870, %v1038
        %1040 = vmatmul.bf16.gmra.mxu0 %v556
        %v1041 = vpop.f32.mrf.mxu0
        %v1042 = vadd.f32 %v873, %v1041
        %v1043 = vpop.f32.mrf.mxu0
        %v1044 = vadd.f32 %v875, %v1043
        %1045 = vmatmul.bf16.gmra.mxu0 %v558
        %v1046 = vpop.f32.mrf.mxu0
        %v1047 = vadd.f32 %v878, %v1046
        %v1048 = vpop.f32.mrf.mxu0
        %v1049 = vadd.f32 %v880, %v1048
        %1050 = vmatmul.bf16.gmra.mxu0 %v560
        %v1051 = vpop.f32.mrf.mxu0
        %v1052 = vadd.f32 %v883, %v1051
        %v1053 = vpop.f32.mrf.mxu0
        %v1054 = vadd.f32 %v885, %v1053
        %1055 = vmatmul.bf16.gmra.mxu0 %v562
        %v1056 = vpop.f32.mrf.mxu0
        %v1057 = vadd.f32 %v888, %v1056
        %v1058 = vpop.f32.mrf.mxu0
        %v1059 = vadd.f32 %v890, %v1058
        %1060 = vdwg.mxu0
        %v1061 = vmax.f32 %v902, 0.0
        %v1062 = vmax.f32 %v904, 0.0
        %v1063 = vmax.f32 %v907, 0.0
        %v1064 = vmax.f32 %v909, 0.0
        %v1065 = vmax.f32 %v912, 0.0
        %v1066 = vmax.f32 %v914, 0.0
        %v1067 = vmax.f32 %v917, 0.0
        %v1068 = vmax.f32 %v919, 0.0
        %v1069 = vmax.f32 %v922, 0.0
        %v1070 = vmax.f32 %v924, 0.0
        %v1071 = vmax.f32 %v927, 0.0
        %v1072 = vmax.f32 %v929, 0.0
        %v1073 = vmax.f32 %v932, 0.0
        %v1074 = vmax.f32 %v934, 0.0
        %v1075 = vmax.f32 %v937, 0.0
        %v1076 = vmax.f32 %v939, 0.0
        %v1077 = vmax.f32 %v942, 0.0
        %v1078 = vmax.f32 %v944, 0.0
        %v1079 = vmax.f32 %v947, 0.0
        %v1080 = vmax.f32 %v949, 0.0
        %v1081 = vmax.f32 %v952, 0.0
        %v1082 = vmax.f32 %v954, 0.0
        %v1083 = vmax.f32 %v957, 0.0
        %v1084 = vmax.f32 %v959, 0.0
        %v1085 = vmax.f32 %v962, 0.0
        %v1086 = vmax.f32 %v964, 0.0
        %v1087 = vmax.f32 %v967, 0.0
        %v1088 = vmax.f32 %v969, 0.0
        %v1089 = vmax.f32 %v972, 0.0
        %v1090 = vmax.f32 %v974, 0.0
        %v1091 = vmax.f32 %v977, 0.0
        %v1092 = vmax.f32 %v979, 0.0
        %v1093 = vmax.f32 %v982, 0.0
        %v1094 = vmax.f32 %v984, 0.0
        %v1095 = vmax.f32 %v987, 0.0
        %v1096 = vmax.f32 %v989, 0.0
        %v1097 = vmax.f32 %v992, 0.0
        %v1098 = vmax.f32 %v994, 0.0
        %v1099 = vmax.f32 %v997, 0.0
        %v1100 = vmax.f32 %v999, 0.0
        %v1101 = vmax.f32 %v1002, 0.0
        %v1102 = vmax.f32 %v1004, 0.0
        %v1103 = vmax.f32 %v1007, 0.0
        %v1104 = vmax.f32 %v1009, 0.0
        %v1105 = vmax.f32 %v1012, 0.0
        %v1106 = vmax.f32 %v1014, 0.0
        %v1107 = vmax.f32 %v1017, 0.0
        %v1108 = vmax.f32 %v1019, 0.0
        %v1109 = vmax.f32 %v1022, 0.0
        %v1110 = vmax.f32 %v1024, 0.0
        %v1111 = vmax.f32 %v1027, 0.0
        %v1112 = vmax.f32 %v1029, 0.0
        %v1113 = vmax.f32 %v1032, 0.0
        %v1114 = vmax.f32 %v1034, 0.0
        %v1115 = vmax.f32 %v1037, 0.0
        %v1116 = vmax.f32 %v1039, 0.0
        %v1117 = vmax.f32 %v1042, 0.0
        %v1118 = vmax.f32 %v1044, 0.0
        %v1119 = vmax.f32 %v1047, 0.0
        %v1120 = vmax.f32 %v1049, 0.0
        %v1121 = vmax.f32 %v1052, 0.0
        %v1122 = vmax.f32 %v1054, 0.0
        %v1123 = vmax.f32 %v1057, 0.0
        %v1124 = vmax.f32 %v1059, 0.0
        %v1125 = vpack.c.bf16 %v1061, %v1061
        %v1126 = vpack.c.bf16 %v1062, %v1062
        %v1127 = vpack.c.bf16 %v1063, %v1063
        %v1128 = vpack.c.bf16 %v1064, %v1064
        %v1129 = vpack.c.bf16 %v1065, %v1065
        %v1130 = vpack.c.bf16 %v1066, %v1066
        %v1131 = vpack.c.bf16 %v1067, %v1067
        %v1132 = vpack.c.bf16 %v1068, %v1068
        %v1133 = vpack.c.bf16 %v1069, %v1069
        %v1134 = vpack.c.bf16 %v1070, %v1070
        %v1135 = vpack.c.bf16 %v1071, %v1071
        %v1136 = vpack.c.bf16 %v1072, %v1072
        %v1137 = vpack.c.bf16 %v1073, %v1073
        %v1138 = vpack.c.bf16 %v1074, %v1074
        %v1139 = vpack.c.bf16 %v1075, %v1075
        %v1140 = vpack.c.bf16 %v1076, %v1076
        %v1141 = vpack.c.bf16 %v1077, %v1077
        %v1142 = vpack.c.bf16 %v1078, %v1078
        %v1143 = vpack.c.bf16 %v1079, %v1079
        %v1144 = vpack.c.bf16 %v1080, %v1080
        %v1145 = vpack.c.bf16 %v1081, %v1081
        %v1146 = vpack.c.bf16 %v1082, %v1082
        %v1147 = vpack.c.bf16 %v1083, %v1083
        %v1148 = vpack.c.bf16 %v1084, %v1084
        %v1149 = vpack.c.bf16 %v1085, %v1085
        %v1150 = vpack.c.bf16 %v1086, %v1086
        %v1151 = vpack.c.bf16 %v1087, %v1087
        %v1152 = vpack.c.bf16 %v1088, %v1088
        %v1153 = vpack.c.bf16 %v1089, %v1089
        %v1154 = vpack.c.bf16 %v1090, %v1090
        %v1155 = vpack.c.bf16 %v1091, %v1091
        %v1156 = vpack.c.bf16 %v1092, %v1092
        %v1157 = vpack.c.bf16 %v1093, %v1093
        %v1158 = vpack.c.bf16 %v1094, %v1094
        %v1159 = vpack.c.bf16 %v1095, %v1095
        %v1160 = vpack.c.bf16 %v1096, %v1096
        %v1161 = vpack.c.bf16 %v1097, %v1097
        %v1162 = vpack.c.bf16 %v1098, %v1098
        %v1163 = vpack.c.bf16 %v1099, %v1099
        %v1164 = vpack.c.bf16 %v1100, %v1100
        %v1165 = vpack.c.bf16 %v1101, %v1101
        %v1166 = vpack.c.bf16 %v1102, %v1102
        %v1167 = vpack.c.bf16 %v1103, %v1103
        %v1168 = vpack.c.bf16 %v1104, %v1104
        %v1169 = vpack.c.bf16 %v1105, %v1105
        %v1170 = vpack.c.bf16 %v1106, %v1106
        %v1171 = vpack.c.bf16 %v1107, %v1107
        %v1172 = vpack.c.bf16 %v1108, %v1108
        %v1173 = vpack.c.bf16 %v1109, %v1109
        %v1174 = vpack.c.bf16 %v1110, %v1110
        %v1175 = vpack.c.bf16 %v1111, %v1111
        %v1176 = vpack.c.bf16 %v1112, %v1112
        %v1177 = vpack.c.bf16 %v1113, %v1113
        %v1178 = vpack.c.bf16 %v1114, %v1114
        %v1179 = vpack.c.bf16 %v1115, %v1115
        %v1180 = vpack.c.bf16 %v1116, %v1116
        %v1181 = vpack.c.bf16 %v1117, %v1117
        %v1182 = vpack.c.bf16 %v1118, %v1118
        %v1183 = vpack.c.bf16 %v1119, %v1119
        %v1184 = vpack.c.bf16 %v1120, %v1120
        %v1185 = vpack.c.bf16 %v1121, %v1121
        %v1186 = vpack.c.bf16 %v1122, %v1122
        %v1187 = vpack.c.bf16 %v1123, %v1123
        %v1188 = vpack.c.bf16 %v1124, %v1124
        %vm1189 = vcmask 257024
        %1190 = vst.msk [vmem:[%s195] sm:$0xf] %vm1189, %v1125
        %1191 = vst.msk [vmem:[%s195 + $0x4] sm:$0xf] %vm1189, %v1126
        %1192 = vst.msk [vmem:[%s195 + $0x8] sm:$0xf] %vm1189, %v1127
        %1193 = vst.msk [vmem:[%s195 + $0xc] sm:$0xf] %vm1189, %v1128
        %1194 = vst.msk [vmem:[%s195 + $0x10] sm:$0xf] %vm1189, %v1129
        %1195 = vst.msk [vmem:[%s195 + $0x14] sm:$0xf] %vm1189, %v1130
        %1196 = vst.msk [vmem:[%s195 + $0x18] sm:$0xf] %vm1189, %v1131
        %1197 = vst.msk [vmem:[%s195 + $0x1c] sm:$0xf] %vm1189, %v1132
        %1198 = vst.msk [vmem:[%s195 + $0x20] sm:$0xf] %vm1189, %v1133
        %1199 = vst.msk [vmem:[%s195 + $0x24] sm:$0xf] %vm1189, %v1134
        %1200 = vst.msk [vmem:[%s195 + $0x28] sm:$0xf] %vm1189, %v1135
        %1201 = vst.msk [vmem:[%s195 + $0x2c] sm:$0xf] %vm1189, %v1136
        %1202 = vst.msk [vmem:[%s195 + $0x30] sm:$0xf] %vm1189, %v1137
        %1203 = vst.msk [vmem:[%s195 + $0x34] sm:$0xf] %vm1189, %v1138
        %1204 = vst.msk [vmem:[%s195 + $0x38] sm:$0xf] %vm1189, %v1139
        %1205 = vst.msk [vmem:[%s195 + $0x3c] sm:$0xf] %vm1189, %v1140
        %1206 = vst.msk [vmem:[%s195 + $0x40] sm:$0xf] %vm1189, %v1141
        %1207 = vst.msk [vmem:[%s195 + $0x44] sm:$0xf] %vm1189, %v1142
        %1208 = vst.msk [vmem:[%s195 + $0x48] sm:$0xf] %vm1189, %v1143
        %1209 = vst.msk [vmem:[%s195 + $0x4c] sm:$0xf] %vm1189, %v1144
        %1210 = vst.msk [vmem:[%s195 + $0x50] sm:$0xf] %vm1189, %v1145
        %1211 = vst.msk [vmem:[%s195 + $0x54] sm:$0xf] %vm1189, %v1146
        %1212 = vst.msk [vmem:[%s195 + $0x58] sm:$0xf] %vm1189, %v1147
        %1213 = vst.msk [vmem:[%s195 + $0x5c] sm:$0xf] %vm1189, %v1148
        %1214 = vst.msk [vmem:[%s195 + $0x60] sm:$0xf] %vm1189, %v1149
        %1215 = vst.msk [vmem:[%s195 + $0x64] sm:$0xf] %vm1189, %v1150
        %1216 = vst.msk [vmem:[%s195 + $0x68] sm:$0xf] %vm1189, %v1151
        %1217 = vst.msk [vmem:[%s195 + $0x6c] sm:$0xf] %vm1189, %v1152
        %1218 = vst.msk [vmem:[%s195 + $0x70] sm:$0xf] %vm1189, %v1153
        %1219 = vst.msk [vmem:[%s195 + $0x74] sm:$0xf] %vm1189, %v1154
        %1220 = vst.msk [vmem:[%s195 + $0x78] sm:$0xf] %vm1189, %v1155
        %1221 = vst.msk [vmem:[%s195 + $0x7c] sm:$0xf] %vm1189, %v1156
        %1222 = vst.msk [vmem:[%s195 + $0x80] sm:$0xf] %vm1189, %v1157
        %1223 = vst.msk [vmem:[%s195 + $0x84] sm:$0xf] %vm1189, %v1158
        %1224 = vst.msk [vmem:[%s195 + $0x88] sm:$0xf] %vm1189, %v1159
        %1225 = vst.msk [vmem:[%s195 + $0x8c] sm:$0xf] %vm1189, %v1160
        %1226 = vst.msk [vmem:[%s195 + $0x90] sm:$0xf] %vm1189, %v1161
        %1227 = vst.msk [vmem:[%s195 + $0x94] sm:$0xf] %vm1189, %v1162
        %1228 = vst.msk [vmem:[%s195 + $0x98] sm:$0xf] %vm1189, %v1163
        %1229 = vst.msk [vmem:[%s195 + $0x9c] sm:$0xf] %vm1189, %v1164
        %1230 = vst.msk [vmem:[%s195 + $0xa0] sm:$0xf] %vm1189, %v1165
        %1231 = vst.msk [vmem:[%s195 + $0xa4] sm:$0xf] %vm1189, %v1166
        %1232 = vst.msk [vmem:[%s195 + $0xa8] sm:$0xf] %vm1189, %v1167
        %1233 = vst.msk [vmem:[%s195 + $0xac] sm:$0xf] %vm1189, %v1168
        %1234 = vst.msk [vmem:[%s195 + $0xb0] sm:$0xf] %vm1189, %v1169
        %1235 = vst.msk [vmem:[%s195 + $0xb4] sm:$0xf] %vm1189, %v1170
        %1236 = vst.msk [vmem:[%s195 + $0xb8] sm:$0xf] %vm1189, %v1171
        %1237 = vst.msk [vmem:[%s195 + $0xbc] sm:$0xf] %vm1189, %v1172
        %1238 = vst.msk [vmem:[%s195 + $0xc0] sm:$0xf] %vm1189, %v1173
        %1239 = vst.msk [vmem:[%s195 + $0xc4] sm:$0xf] %vm1189, %v1174
        %1240 = vst.msk [vmem:[%s195 + $0xc8] sm:$0xf] %vm1189, %v1175
        %1241 = vst.msk [vmem:[%s195 + $0xcc] sm:$0xf] %vm1189, %v1176
        %1242 = vst.msk [vmem:[%s195 + $0xd0] sm:$0xf] %vm1189, %v1177
        %1243 = vst.msk [vmem:[%s195 + $0xd4] sm:$0xf] %vm1189, %v1178
        %1244 = vst.msk [vmem:[%s195 + $0xd8] sm:$0xf] %vm1189, %v1179
        %1245 = vst.msk [vmem:[%s195 + $0xdc] sm:$0xf] %vm1189, %v1180
        %1246 = vst.msk [vmem:[%s195 + $0xe0] sm:$0xf] %vm1189, %v1181
        %1247 = vst.msk [vmem:[%s195 + $0xe4] sm:$0xf] %vm1189, %v1182
        %1248 = vst.msk [vmem:[%s195 + $0xe8] sm:$0xf] %vm1189, %v1183
        %1249 = vst.msk [vmem:[%s195 + $0xec] sm:$0xf] %vm1189, %v1184
        %1250 = vst.msk [vmem:[%s195 + $0xf0] sm:$0xf] %vm1189, %v1185
        %1251 = vst.msk [vmem:[%s195 + $0xf4] sm:$0xf] %vm1189, %v1186
        %1252 = vst.msk [vmem:[%s195 + $0xf8] sm:$0xf] %vm1189, %v1187
        %1253 = vst.msk [vmem:[%s195 + $0xfc] sm:$0xf] %vm1189, %v1188
        %s1254 = sand.u32 %s93, 1
        %s1255 = sand.u32 %s93, 1
        %s1256 = smul.addr %s1255, 256
        %s1257 = scalar_lea.vmem [#allocation4], %s1256
        // Predicated region
        $region37: #{tpu_custom_call.1} parent=31 // pred_check
          %p1258 = pneg %p103
        $region38: #{tpu_custom_call.1} parent=31 // pred_check_branch
          %1260 = sbr.rel (%p1258) target = $region40
        $region39: #{tpu_custom_call.1} parent=31 // pred_region
          %s1261 = smul.u32 64, %s17
          %s1262 = ssub.s32 100, %s1261
          %p1263 = scmp.lt.s32.totalorder %s1262, 64
          %s1264 = scalar_select %p1263, %s1262, 64
          %s1265 = smul.u32 4, %s1264
          %p1266 = scmp.ne.s32.totalorder 0, %s1265
          %s1267 = smul.addr %s1261, 4
          %s1268 = scalar_lea.vmem %s3, %s1267
          // Predicated region
          $region41: #{tpu_custom_call.1} parent=39 // pred_check
            %p1269 = pneg %p1266
          $region42: #{tpu_custom_call.1} parent=39 // pred_check_branch
            %1271 = sbr.rel (%p1269) target = $region44
          $region43: #{tpu_custom_call.1} parent=39 // pred_region
            // Predicated region
            $region45: #{tpu_custom_call.1} parent=43 // pred_check
              _
            $region46: #{tpu_custom_call.1} parent=43 // pred_check_branch
              %1273 = sbr.rel target = $region48
            $region47: #{tpu_custom_call.1} parent=43 // pred_region
              // Predicated region
              $region67: #{tpu_custom_call.1} parent=47 // pred_check
                _
              $region68: #{tpu_custom_call.1} parent=47 // pred_check_branch
                %1385 = sbr.rel (0) target = $region70
              $region69: #{tpu_custom_call.1} parent=47 // pred_region
                %s1387 = ssub.s32 16, 1
                %s1388 = sshrl.u32 %s1264, 5
                // While loop
                $region71: #{tpu_custom_call.1} parent=69 // loop_pre_header
                  _
                $region72: #{tpu_custom_call.1} parent=69 // loop_header
                  %s1390 = sphi 0, %s1392
                  %p1391 = scmp.ge.s32.totalorder %s1390, %s1388
                  %s1395 = sphi 0, %s1464
                  %s1396 = sphi %s1257, %s1467
                  %s1397 = sphi %s1268, %s1468
                $region73: #{tpu_custom_call.1} parent=69 // loop_header_branch
                  %1394 = sbr.rel (%p1391) target = $region77
                $region74: #{tpu_custom_call.1} parent=69 // loop_body
                  %v1398 = vld [vmem:[%s1396] sm:%s1387]
                  %1399 = vst [vmem:[%s1397] sm:%s1387] %v1398
                  %v1400 = vld [vmem:[%s1396 + $0x4] sm:%s1387]
                  %1401 = vst [vmem:[%s1397 + $0x4] sm:%s1387] %v1400
                  %v1402 = vld [vmem:[%s1396 + $0x8] sm:%s1387]
                  %1403 = vst [vmem:[%s1397 + $0x8] sm:%s1387] %v1402
                  %v1404 = vld [vmem:[%s1396 + $0xc] sm:%s1387]
                  %1405 = vst [vmem:[%s1397 + $0xc] sm:%s1387] %v1404
                  %v1406 = vld [vmem:[%s1396 + $0x10] sm:%s1387]
                  %1407 = vst [vmem:[%s1397 + $0x10] sm:%s1387] %v1406
                  %v1408 = vld [vmem:[%s1396 + $0x14] sm:%s1387]
                  %1409 = vst [vmem:[%s1397 + $0x14] sm:%s1387] %v1408
                  %v1410 = vld [vmem:[%s1396 + $0x18] sm:%s1387]
                  %1411 = vst [vmem:[%s1397 + $0x18] sm:%s1387] %v1410
                  %v1412 = vld [vmem:[%s1396 + $0x1c] sm:%s1387]
                  %1413 = vst [vmem:[%s1397 + $0x1c] sm:%s1387] %v1412
                  %v1414 = vld [vmem:[%s1396 + $0x20] sm:%s1387]
                  %1415 = vst [vmem:[%s1397 + $0x20] sm:%s1387] %v1414
                  %v1416 = vld [vmem:[%s1396 + $0x24] sm:%s1387]
                  %1417 = vst [vmem:[%s1397 + $0x24] sm:%s1387] %v1416
                  %v1418 = vld [vmem:[%s1396 + $0x28] sm:%s1387]
                  %1419 = vst [vmem:[%s1397 + $0x28] sm:%s1387] %v1418
                  %v1420 = vld [vmem:[%s1396 + $0x2c] sm:%s1387]
                  %1421 = vst [vmem:[%s1397 + $0x2c] sm:%s1387] %v1420
                  %v1422 = vld [vmem:[%s1396 + $0x30] sm:%s1387]
                  %1423 = vst [vmem:[%s1397 + $0x30] sm:%s1387] %v1422
                  %v1424 = vld [vmem:[%s1396 + $0x34] sm:%s1387]
                  %1425 = vst [vmem:[%s1397 + $0x34] sm:%s1387] %v1424
                  %v1426 = vld [vmem:[%s1396 + $0x38] sm:%s1387]
                  %1427 = vst [vmem:[%s1397 + $0x38] sm:%s1387] %v1426
                  %v1428 = vld [vmem:[%s1396 + $0x3c] sm:%s1387]
                  %1429 = vst [vmem:[%s1397 + $0x3c] sm:%s1387] %v1428
                  %v1430 = vld [vmem:[%s1396 + $0x40] sm:%s1387]
                  %1431 = vst [vmem:[%s1397 + $0x40] sm:%s1387] %v1430
                  %v1432 = vld [vmem:[%s1396 + $0x44] sm:%s1387]
                  %1433 = vst [vmem:[%s1397 + $0x44] sm:%s1387] %v1432
                  %v1434 = vld [vmem:[%s1396 + $0x48] sm:%s1387]
                  %1435 = vst [vmem:[%s1397 + $0x48] sm:%s1387] %v1434
                  %v1436 = vld [vmem:[%s1396 + $0x4c] sm:%s1387]
                  %1437 = vst [vmem:[%s1397 + $0x4c] sm:%s1387] %v1436
                  %v1438 = vld [vmem:[%s1396 + $0x50] sm:%s1387]
                  %1439 = vst [vmem:[%s1397 + $0x50] sm:%s1387] %v1438
                  %v1440 = vld [vmem:[%s1396 + $0x54] sm:%s1387]
                  %1441 = vst [vmem:[%s1397 + $0x54] sm:%s1387] %v1440
                  %v1442 = vld [vmem:[%s1396 + $0x58] sm:%s1387]
                  %1443 = vst [vmem:[%s1397 + $0x58] sm:%s1387] %v1442
                  %v1444 = vld [vmem:[%s1396 + $0x5c] sm:%s1387]
                  %1445 = vst [vmem:[%s1397 + $0x5c] sm:%s1387] %v1444
                  %v1446 = vld [vmem:[%s1396 + $0x60] sm:%s1387]
                  %1447 = vst [vmem:[%s1397 + $0x60] sm:%s1387] %v1446
                  %v1448 = vld [vmem:[%s1396 + $0x64] sm:%s1387]
                  %1449 = vst [vmem:[%s1397 + $0x64] sm:%s1387] %v1448
                  %v1450 = vld [vmem:[%s1396 + $0x68] sm:%s1387]
                  %1451 = vst [vmem:[%s1397 + $0x68] sm:%s1387] %v1450
                  %v1452 = vld [vmem:[%s1396 + $0x6c] sm:%s1387]
                  %1453 = vst [vmem:[%s1397 + $0x6c] sm:%s1387] %v1452
                  %v1454 = vld [vmem:[%s1396 + $0x70] sm:%s1387]
                  %1455 = vst [vmem:[%s1397 + $0x70] sm:%s1387] %v1454
                  %v1456 = vld [vmem:[%s1396 + $0x74] sm:%s1387]
                  %1457 = vst [vmem:[%s1397 + $0x74] sm:%s1387] %v1456
                  %v1458 = vld [vmem:[%s1396 + $0x78] sm:%s1387]
                  %1459 = vst [vmem:[%s1397 + $0x78] sm:%s1387] %v1458
                  %v1460 = vld [vmem:[%s1396 + $0x7c] sm:%s1387]
                  %1461 = vst [vmem:[%s1397 + $0x7c] sm:%s1387] %v1460
                  %s1462 = sadd.s32 1, %s1395
                  %p1463 = scmp.ge.s32.totalorder %s1462, %s1388
                  %s1464 = scalar_select %p1463, 0, %s1462
                  %s1465 = smul.u32 %s1464, 128
                  %s1466 = smul.u32 %s1464, 128
                  %s1467 = scalar_lea.vmem %s1257, %s1465 [#allocation4]
                  %s1468 = scalar_lea.vmem %s1268, %s1466
                $region75: #{tpu_custom_call.1} parent=69 // loop_footer
                  %s1392 = sadd.s32 %s1390, 1
                $region76: #{tpu_custom_call.1} parent=69 // loop_footer_branch
                  %1389 = sbr.rel target = $region72
                $region77: #{tpu_custom_call.1} parent=69 // loop_exit
                  _
                %s1469 = sshrl.u32 %s1264, 5
                %s1470 = sand.u32 %s1264, 31
                %s1471 = smul.u32 %s1469, 32
                %s1472 = smul.u32 4, %s1471
                %s1473 = scalar_lea.vmem %s1257, %s1472 [#allocation4]
                %s1474 = smul.u32 4, %s1471
                %s1475 = scalar_lea.vmem %s1268, %s1474
                // While loop
                $region78: #{tpu_custom_call.1} parent=69 // loop_pre_header
                  _
                $region79: #{tpu_custom_call.1} parent=69 // loop_header
                  %s1477 = sphi 0, %s1479
                  %p1478 = scmp.ge.s32.totalorder %s1477, %s1470
                  %s1482 = sphi 0, %s1489
                  %s1483 = sphi %s1473, %s1492
                  %s1484 = sphi %s1475, %s1493
                $region80: #{tpu_custom_call.1} parent=69 // loop_header_branch
                  %1481 = sbr.rel (%p1478) target = $region84
                $region81: #{tpu_custom_call.1} parent=69 // loop_body
                  %v1485 = vld [vmem:[%s1483] sm:%s1387]
                  %1486 = vst [vmem:[%s1484] sm:%s1387] %v1485
                  %s1487 = sadd.s32 1, %s1482
                  %p1488 = scmp.ge.s32.totalorder %s1487, %s1470
                  %s1489 = scalar_select %p1488, 0, %s1487
                  %s1490 = smul.u32 %s1489, 4
                  %s1491 = smul.u32 %s1489, 4
                  %s1492 = scalar_lea.vmem %s1473, %s1490 [#allocation4]
                  %s1493 = scalar_lea.vmem %s1475, %s1491
                $region82: #{tpu_custom_call.1} parent=69 // loop_footer
                  %s1479 = sadd.s32 %s1477, 1
                $region83: #{tpu_custom_call.1} parent=69 // loop_footer_branch
                  %1476 = sbr.rel target = $region79
                $region84: #{tpu_custom_call.1} parent=69 // loop_exit
                  _
              $region70: #{tpu_custom_call.1} parent=47 // pred_fallthru
                _
            $region48: #{tpu_custom_call.1} parent=43 // pred_fallthru
              _
            // Predicated region
            $region49: #{tpu_custom_call.1} parent=43 // pred_check
              _
            $region50: #{tpu_custom_call.1} parent=43 // pred_check_branch
              %1275 = sbr.rel (0) target = $region52
            $region51: #{tpu_custom_call.1} parent=43 // pred_region
              %s1277 = ssub.s32 16, 1
              %s1278 = sshrl.u32 %s1264, 5
              // While loop
              $region53: #{tpu_custom_call.1} parent=51 // loop_pre_header
                _
              $region54: #{tpu_custom_call.1} parent=51 // loop_header
                %s1280 = sphi 0, %s1282
                %p1281 = scmp.ge.s32.totalorder %s1280, %s1278
                %s1285 = sphi 0, %s1354
                %s1286 = sphi %s1257, %s1357
                %s1287 = sphi %s1268, %s1358
              $region55: #{tpu_custom_call.1} parent=51 // loop_header_branch
                %1284 = sbr.rel (%p1281) target = $region59
              $region56: #{tpu_custom_call.1} parent=51 // loop_body
                %v1288 = vld [vmem:[%s1286] sm:%s1277]
                %1289 = vst [vmem:[%s1287] sm:%s1277] %v1288
                %v1290 = vld [vmem:[%s1286 + $0x4] sm:%s1277]
                %1291 = vst [vmem:[%s1287 + $0x4] sm:%s1277] %v1290
                %v1292 = vld [vmem:[%s1286 + $0x8] sm:%s1277]
                %1293 = vst [vmem:[%s1287 + $0x8] sm:%s1277] %v1292
                %v1294 = vld [vmem:[%s1286 + $0xc] sm:%s1277]
                %1295 = vst [vmem:[%s1287 + $0xc] sm:%s1277] %v1294
                %v1296 = vld [vmem:[%s1286 + $0x10] sm:%s1277]
                %1297 = vst [vmem:[%s1287 + $0x10] sm:%s1277] %v1296
                %v1298 = vld [vmem:[%s1286 + $0x14] sm:%s1277]
                %1299 = vst [vmem:[%s1287 + $0x14] sm:%s1277] %v1298
                %v1300 = vld [vmem:[%s1286 + $0x18] sm:%s1277]
                %1301 = vst [vmem:[%s1287 + $0x18] sm:%s1277] %v1300
                %v1302 = vld [vmem:[%s1286 + $0x1c] sm:%s1277]
                %1303 = vst [vmem:[%s1287 + $0x1c] sm:%s1277] %v1302
                %v1304 = vld [vmem:[%s1286 + $0x20] sm:%s1277]
                %1305 = vst [vmem:[%s1287 + $0x20] sm:%s1277] %v1304
                %v1306 = vld [vmem:[%s1286 + $0x24] sm:%s1277]
                %1307 = vst [vmem:[%s1287 + $0x24] sm:%s1277] %v1306
                %v1308 = vld [vmem:[%s1286 + $0x28] sm:%s1277]
                %1309 = vst [vmem:[%s1287 + $0x28] sm:%s1277] %v1308
                %v1310 = vld [vmem:[%s1286 + $0x2c] sm:%s1277]
                %1311 = vst [vmem:[%s1287 + $0x2c] sm:%s1277] %v1310
                %v1312 = vld [vmem:[%s1286 + $0x30] sm:%s1277]
                %1313 = vst [vmem:[%s1287 + $0x30] sm:%s1277] %v1312
                %v1314 = vld [vmem:[%s1286 + $0x34] sm:%s1277]
                %1315 = vst [vmem:[%s1287 + $0x34] sm:%s1277] %v1314
                %v1316 = vld [vmem:[%s1286 + $0x38] sm:%s1277]
                %1317 = vst [vmem:[%s1287 + $0x38] sm:%s1277] %v1316
                %v1318 = vld [vmem:[%s1286 + $0x3c] sm:%s1277]
                %1319 = vst [vmem:[%s1287 + $0x3c] sm:%s1277] %v1318
                %v1320 = vld [vmem:[%s1286 + $0x40] sm:%s1277]
                %1321 = vst [vmem:[%s1287 + $0x40] sm:%s1277] %v1320
                %v1322 = vld [vmem:[%s1286 + $0x44] sm:%s1277]
                %1323 = vst [vmem:[%s1287 + $0x44] sm:%s1277] %v1322
                %v1324 = vld [vmem:[%s1286 + $0x48] sm:%s1277]
                %1325 = vst [vmem:[%s1287 + $0x48] sm:%s1277] %v1324
                %v1326 = vld [vmem:[%s1286 + $0x4c] sm:%s1277]
                %1327 = vst [vmem:[%s1287 + $0x4c] sm:%s1277] %v1326
                %v1328 = vld [vmem:[%s1286 + $0x50] sm:%s1277]
                %1329 = vst [vmem:[%s1287 + $0x50] sm:%s1277] %v1328
                %v1330 = vld [vmem:[%s1286 + $0x54] sm:%s1277]
                %1331 = vst [vmem:[%s1287 + $0x54] sm:%s1277] %v1330
                %v1332 = vld [vmem:[%s1286 + $0x58] sm:%s1277]
                %1333 = vst [vmem:[%s1287 + $0x58] sm:%s1277] %v1332
                %v1334 = vld [vmem:[%s1286 + $0x5c] sm:%s1277]
                %1335 = vst [vmem:[%s1287 + $0x5c] sm:%s1277] %v1334
                %v1336 = vld [vmem:[%s1286 + $0x60] sm:%s1277]
                %1337 = vst [vmem:[%s1287 + $0x60] sm:%s1277] %v1336
                %v1338 = vld [vmem:[%s1286 + $0x64] sm:%s1277]
                %1339 = vst [vmem:[%s1287 + $0x64] sm:%s1277] %v1338
                %v1340 = vld [vmem:[%s1286 + $0x68] sm:%s1277]
                %1341 = vst [vmem:[%s1287 + $0x68] sm:%s1277] %v1340
                %v1342 = vld [vmem:[%s1286 + $0x6c] sm:%s1277]
                %1343 = vst [vmem:[%s1287 + $0x6c] sm:%s1277] %v1342
                %v1344 = vld [vmem:[%s1286 + $0x70] sm:%s1277]
                %1345 = vst [vmem:[%s1287 + $0x70] sm:%s1277] %v1344
                %v1346 = vld [vmem:[%s1286 + $0x74] sm:%s1277]
                %1347 = vst [vmem:[%s1287 + $0x74] sm:%s1277] %v1346
                %v1348 = vld [vmem:[%s1286 + $0x78] sm:%s1277]
                %1349 = vst [vmem:[%s1287 + $0x78] sm:%s1277] %v1348
                %v1350 = vld [vmem:[%s1286 + $0x7c] sm:%s1277]
                %1351 = vst [vmem:[%s1287 + $0x7c] sm:%s1277] %v1350
                %s1352 = sadd.s32 1, %s1285
                %p1353 = scmp.ge.s32.totalorder %s1352, %s1278
                %s1354 = scalar_select %p1353, 0, %s1352
                %s1355 = smul.u32 %s1354, 128
                %s1356 = smul.u32 %s1354, 128
                %s1357 = scalar_lea.vmem %s1257, %s1355 [#allocation4]
                %s1358 = scalar_lea.vmem %s1268, %s1356
              $region57: #{tpu_custom_call.1} parent=51 // loop_footer
                %s1282 = sadd.s32 %s1280, 1
              $region58: #{tpu_custom_call.1} parent=51 // loop_footer_branch
                %1279 = sbr.rel target = $region54
              $region59: #{tpu_custom_call.1} parent=51 // loop_exit
                _
              %s1359 = sshrl.u32 %s1264, 5
              %s1360 = sand.u32 %s1264, 31
              %s1361 = smul.u32 %s1359, 32
              %s1362 = smul.u32 4, %s1361
              %s1363 = scalar_lea.vmem %s1257, %s1362 [#allocation4]
              %s1364 = smul.u32 4, %s1361
              %s1365 = scalar_lea.vmem %s1268, %s1364
              // While loop
              $region60: #{tpu_custom_call.1} parent=51 // loop_pre_header
                _
              $region61: #{tpu_custom_call.1} parent=51 // loop_header
                %s1367 = sphi 0, %s1369
                %p1368 = scmp.ge.s32.totalorder %s1367, %s1360
                %s1372 = sphi 0, %s1379
                %s1373 = sphi %s1363, %s1382
                %s1374 = sphi %s1365, %s1383
              $region62: #{tpu_custom_call.1} parent=51 // loop_header_branch
                %1371 = sbr.rel (%p1368) target = $region66
              $region63: #{tpu_custom_call.1} parent=51 // loop_body
                %v1375 = vld [vmem:[%s1373] sm:%s1277]
                %1376 = vst [vmem:[%s1374] sm:%s1277] %v1375
                %s1377 = sadd.s32 1, %s1372
                %p1378 = scmp.ge.s32.totalorder %s1377, %s1360
                %s1379 = scalar_select %p1378, 0, %s1377
                %s1380 = smul.u32 %s1379, 4
                %s1381 = smul.u32 %s1379, 4
                %s1382 = scalar_lea.vmem %s1363, %s1380 [#allocation4]
                %s1383 = scalar_lea.vmem %s1365, %s1381
              $region64: #{tpu_custom_call.1} parent=51 // loop_footer
                %s1369 = sadd.s32 %s1367, 1
              $region65: #{tpu_custom_call.1} parent=51 // loop_footer_branch
                %1366 = sbr.rel target = $region61
              $region66: #{tpu_custom_call.1} parent=51 // loop_exit
                _
            $region52: #{tpu_custom_call.1} parent=43 // pred_fallthru
              _
          $region44: #{tpu_custom_call.1} parent=39 // pred_fallthru
            _
          %1494 = vnop
        $region40: #{tpu_custom_call.1} parent=31 // pred_fallthru
          _
      $region32: #{tpu_custom_call.1} parent=5 // pred_fallthru
        _
      %p1495 = scmp.le.s32.totalorder 2, %s12
      // Predicated region
      $region85: #{tpu_custom_call.1} parent=5 // pred_check
        %p1496 = pneg %p1495
      $region86: #{tpu_custom_call.1} parent=5 // pred_check_branch
        %1498 = sbr.rel (%p1496) target = $region88
      $region87: #{tpu_custom_call.1} parent=5 // pred_region
        %s1499 = ssub.s32 %s12, 2
        // Predicated region
        $region89: #{tpu_custom_call.1} parent=87 // pred_check
          %p1500 = pneg %p109
        $region90: #{tpu_custom_call.1} parent=87 // pred_check_branch
          %1502 = sbr.rel (%p1500) target = $region92
        $region91: #{tpu_custom_call.1} parent=87 // pred_region
          %s1503 = sand.u32 %s94, 1
          %s1504 = sand.u32 %s94, 1
          %s1505 = smul.addr %s1504, 256
          %s1506 = scalar_lea.vmem [#allocation4], %s1505
        $region92: #{tpu_custom_call.1} parent=87 // pred_fallthru
          _
      $region88: #{tpu_custom_call.1} parent=5 // pred_fallthru
        _
    $region6: #{tpu_custom_call.1} parent=1 // loop_footer
      %s16 = sadd.s32 1, %s12
    $region7: #{tpu_custom_call.1} parent=1 // loop_footer_branch
      %11 = sbr.rel target = $region3
    $region8: #{tpu_custom_call.1} parent=1 // loop_exit
      _
    %1507 = vsyncpa [#allocation3], 1
    %s1508 = scalar_lea.sflag [#allocation3], 1
    %1509 = vsyncpa %s1508, 1

</llo_original>
